<compile_context>
chip_gen: v7x
topology: tpu7x:2x2x1
jax: 0.10.0
libtpu: 0.0.40
codegen_flags: <defaults>
</compile_context>

<pallas_src>
import functools

import jax
import jax.numpy as jnp
from jax.experimental import pallas as pl
from jax.experimental.pallas import tpu as pltpu


def _round_up(x, m):
    return ((x + m - 1) // m) * m


def _spconv_kernel(x_ref, w_ref, b_ref, o_ref, *, khp, kwp, stride):
    # x_ref: (1, Hp, Wp, Cin)          symmetrically padded input (one batch elem)
    # w_ref: (KHp*KWp*Cin, Cout_pad)   repacked + flattened weights
    # b_ref: (1, Cout_pad)             f32 bias (zero padded along Cout)
    # o_ref: (1, Ho, Wo, Cout_pad)
    _, _, _, cin = x_ref.shape
    _, ho, wo, cout_p = o_ref.shape

    # im2col: one shifted window per tap, concatenated along channels, so the
    # whole conv becomes a single MXU matmul with contraction K = KHp*KWp*Cin.
    patches = []
    for kh in range(khp):
        for kw in range(kwp):
            if stride == 1:
                p = x_ref[0, pl.ds(kh, ho), pl.ds(kw, wo), :]
            else:
                # TODO(synk): stride>1 path uses strided sublane reads; a
                # wrapper-side space-to-depth would keep loads contiguous.
                p = x_ref[0, pl.ds(kh, ho, stride), pl.ds(kw, wo, stride), :]
            patches.append(p.reshape(ho * wo, cin))
    pm = jnp.concatenate(patches, axis=-1)              # (Ho*Wo, KHp*KWp*Cin)

    acc = jnp.dot(pm, w_ref[...], preferred_element_type=jnp.float32)
    acc = acc + b_ref[...]                               # f32 bias broadcast
    o_ref[...] = acc.reshape(1, ho, wo, cout_p).astype(o_ref.dtype)


def _repack_weight(weight_oihw):
    """Fold SpConv2d's four asymmetric pads into an equivalent (K+1)x(K+1) kernel.

    Group g's KxK kernel is placed at corner (row_off, col_off) of the enlarged
    kernel:  g0 (pad left,top) -> (0,0); g1 (right,top) -> (0,1);
             g2 (left,bottom) -> (1,0); g3 (right,bottom) -> (1,1).
    """
    cout, cin, kh, kw = weight_oihw.shape
    assert cin % 4 == 0
    q = cin // 4
    w_new = jnp.zeros((cout, cin, kh + 1, kw + 1), weight_oihw.dtype)
    for g, (ro, co) in enumerate(((0, 0), (0, 1), (1, 0), (1, 1))):
        w_new = w_new.at[:, g * q:(g + 1) * q, ro:ro + kh, co:co + kw].set(
            weight_oihw[:, g * q:(g + 1) * q])
    return w_new


def sp_conv2d(x_nchw, weight_oihw, bias, *, stride=1, padding=0):
    """Forward pass of SpConv2d.  Matches the PyTorch module semantics."""
    n, c, h, w = x_nchw.shape
    assert c % 4 == 0
    cout, cin, kh, kw = weight_oihw.shape
    assert cin == c
    khp, kwp = kh + 1, kw + 1

    # One symmetric spatial pad replaces the 4 asymmetric pads + concat + conv pad.
    pad = 1 + padding
    x_nhwc = jnp.transpose(x_nchw, (0, 2, 3, 1))
    x_nhwc = jnp.pad(x_nhwc, ((0, 0), (pad, pad), (pad, pad), (0, 0)))
    hp, wp = h + 2 * pad, w + 2 * pad
    ho = (hp - khp) // stride + 1
    wo = (wp - kwp) // stride + 1

    # Repack weights to (K+1)x(K+1), flatten to 2-D, pad Cout to a lane-dense width.
    cout_p = _round_up(cout, 128)
    w_hwio = jnp.transpose(_repack_weight(weight_oihw), (2, 3, 1, 0))  # (KHp,KWp,Cin,Cout)
    w2d = w_hwio.reshape(khp * kwp * cin, cout)
    w2d = jnp.pad(w2d, ((0, 0), (0, cout_p - cout))).astype(x_nchw.dtype)
    b2 = jnp.pad(bias.astype(jnp.float32), (0, cout_p - cout)).reshape(1, cout_p)

    kernel = functools.partial(_spconv_kernel, khp=khp, kwp=kwp, stride=stride)
    itemsize = jnp.dtype(x_nchw.dtype).itemsize
    cost = pl.CostEstimate(
        flops=2 * n * ho * wo * khp * kwp * cin * cout_p,
        transcendentals=0,
        bytes_accessed=(n * hp * wp * cin * itemsize
                        + w2d.size * itemsize
                        + b2.size * 4
                        + n * ho * wo * cout_p * itemsize),
    )

    out_padded = pl.pallas_call(
        kernel,
        out_shape=jax.ShapeDtypeStruct((n, ho, wo, cout_p), x_nchw.dtype),
        grid_spec=pltpu.PrefetchScalarGridSpec(
            num_scalar_prefetch=0,
            grid=(n,),
            in_specs=[
                pl.BlockSpec((1, hp, wp, cin), lambda i: (i, 0, 0, 0)),
                pl.BlockSpec((khp * kwp * cin, cout_p), lambda i: (0, 0)),
                pl.BlockSpec((1, cout_p), lambda i: (0, 0)),
            ],
            out_specs=pl.BlockSpec((1, ho, wo, cout_p), lambda i: (i, 0, 0, 0)),
        ),
        compiler_params=pltpu.CompilerParams(
            dimension_semantics=("parallel",)),
        cost_estimate=cost,
    )(x_nhwc, w2d, b2)

    # Drop the Cout lane padding and return to NCHW.
    out = out_padded[..., :cout]
    return jnp.transpose(out, (0, 3, 1, 2))


def _reference(x_nchw, weight_oihw, bias, *, stride=1, padding=0):
    """Pure-JAX reference replicating the PyTorch forward (for sanity check)."""
    n, c, h, w = x_nchw.shape
    q = c // 4

    def pad4(t, wl, wr, ht, hb):
        return jnp.pad(t, ((0, 0), (0, 0), (ht, hb), (wl, wr)))

    xcat = jnp.concatenate([
        pad4(x_nchw[:, :q], 1, 0, 1, 0),
        pad4(x_nchw[:, q:2 * q], 0, 1, 1, 0),
        pad4(x_nchw[:, 2 * q:3 * q], 1, 0, 0, 1),
        pad4(x_nchw[:, 3 * q:], 0, 1, 0, 1)], axis=1)
    out = jax.lax.conv_general_dilated(
        xcat, weight_oihw, window_strides=(stride, stride),
        padding=[(padding, padding), (padding, padding)],
        dimension_numbers=("NCHW", "OIHW", "NCHW"))
    return out + bias[None, :, None, None]


if __name__ == "__main__":
    # Module hyperparameters: in_channels=4, out_channels=8, kernel_size=2
    # (even kernel, as intended by SpConv2d), stride=1, padding=0.
    N, C_IN, H, W = 2, 4, 16, 16
    C_OUT, K, STRIDE, PAD = 8, 2, 1, 0

    key = jax.random.PRNGKey(0)
    kx, kwgt, kb = jax.random.split(key, 3)
    x = jax.random.normal(kx, (N, C_IN, H, W), dtype=jnp.float32)
    # PyTorch-style uniform init with bound 1/sqrt(fan_in)
    fan_in = C_IN * K * K
    bound = 1.0 / (fan_in ** 0.5)
    weight = jax.random.uniform(kwgt, (C_OUT, C_IN, K, K),
                                minval=-bound, maxval=bound, dtype=jnp.float32)
    bias = jax.random.uniform(kb, (C_OUT,),
                              minval=-bound, maxval=bound, dtype=jnp.float32)

    out = sp_conv2d(x, weight, bias, stride=STRIDE, padding=PAD)
    out = jax.block_until_ready(out)

    ref = _reference(x, weight, bias, stride=STRIDE, padding=PAD)
    assert out.shape == (N, C_OUT, H, W), out.shape
    assert jnp.allclose(out, ref, atol=1e-4, rtol=1e-4), \
        float(jnp.max(jnp.abs(out - ref)))

    print("KERNEL_OK")
</pallas_src>

<mosaic_0001>
module attributes {stable_mosaic.version = 11 : i64} {
  func.func @_spconv_kernel(%arg0: i32, %arg1: memref<1x18x18x4xf32, #tpu.memory_space<vmem>>, %arg2: memref<36x128xf32, #tpu.memory_space<vmem>>, %arg3: memref<1x128xf32, #tpu.memory_space<vmem>>, %arg4: memref<1x16x16x128xf32, #tpu.memory_space<vmem>>) attributes {dimension_semantics = [#tpu.dimension_semantics<parallel>], iteration_bounds = array<i64: 2>, scalar_prefetch = 0 : i64, scratch_operands = 0 : i64, tpu.core_type = #tpu.core_type<tc>, window_params = [{transform_indices = @transform_0, window_bounds = array<i64: 1, 18, 18, 4>}, {pipeline_mode = #tpu.pipeline_mode<synchronous>, transform_indices = @transform_1, window_bounds = array<i64: 36, 128>}, {pipeline_mode = #tpu.pipeline_mode<synchronous>, transform_indices = @transform_2, window_bounds = array<i64: 1, 128>}, {transform_indices = @transform_3, window_bounds = array<i64: 1, 16, 16, 128>}]} {
    %c0 = arith.constant 0 : index
    %c0_0 = arith.constant 0 : index
    %c0_1 = arith.constant 0 : index
    %c0_2 = arith.constant 0 : index
    %0 = vector.load %arg1[%c0, %c0_0, %c0_1, %c0_2] : memref<1x18x18x4xf32, #tpu.memory_space<vmem>>, vector<1x16x16x4xf32>
    %1 = vector.shape_cast %0 : vector<1x16x16x4xf32> to vector<16x16x4xf32>
    %2 = vector.shape_cast %1 : vector<16x16x4xf32> to vector<256x4xf32>
    %c0_3 = arith.constant 0 : index
    %c0_4 = arith.constant 0 : index
    %c1 = arith.constant 1 : index
    %c0_5 = arith.constant 0 : index
    %3 = vector.load %arg1[%c0_3, %c0_4, %c1, %c0_5] : memref<1x18x18x4xf32, #tpu.memory_space<vmem>>, vector<1x16x16x4xf32>
    %4 = vector.shape_cast %3 : vector<1x16x16x4xf32> to vector<16x16x4xf32>
    %5 = vector.shape_cast %4 : vector<16x16x4xf32> to vector<256x4xf32>
    %c0_6 = arith.constant 0 : index
    %c0_7 = arith.constant 0 : index
    %c2 = arith.constant 2 : index
    %c0_8 = arith.constant 0 : index
    %6 = vector.load %arg1[%c0_6, %c0_7, %c2, %c0_8] : memref<1x18x18x4xf32, #tpu.memory_space<vmem>>, vector<1x16x16x4xf32>
    %7 = vector.shape_cast %6 : vector<1x16x16x4xf32> to vector<16x16x4xf32>
    %8 = vector.shape_cast %7 : vector<16x16x4xf32> to vector<256x4xf32>
    %c0_9 = arith.constant 0 : index
    %c1_10 = arith.constant 1 : index
    %c0_11 = arith.constant 0 : index
    %c0_12 = arith.constant 0 : index
    %9 = vector.load %arg1[%c0_9, %c1_10, %c0_11, %c0_12] : memref<1x18x18x4xf32, #tpu.memory_space<vmem>>, vector<1x16x16x4xf32>
    %10 = vector.shape_cast %9 : vector<1x16x16x4xf32> to vector<16x16x4xf32>
    %11 = vector.shape_cast %10 : vector<16x16x4xf32> to vector<256x4xf32>
    %c0_13 = arith.constant 0 : index
    %c1_14 = arith.constant 1 : index
    %c1_15 = arith.constant 1 : index
    %c0_16 = arith.constant 0 : index
    %12 = vector.load %arg1[%c0_13, %c1_14, %c1_15, %c0_16] : memref<1x18x18x4xf32, #tpu.memory_space<vmem>>, vector<1x16x16x4xf32>
    %13 = vector.shape_cast %12 : vector<1x16x16x4xf32> to vector<16x16x4xf32>
    %14 = vector.shape_cast %13 : vector<16x16x4xf32> to vector<256x4xf32>
    %c0_17 = arith.constant 0 : index
    %c1_18 = arith.constant 1 : index
    %c2_19 = arith.constant 2 : index
    %c0_20 = arith.constant 0 : index
    %15 = vector.load %arg1[%c0_17, %c1_18, %c2_19, %c0_20] : memref<1x18x18x4xf32, #tpu.memory_space<vmem>>, vector<1x16x16x4xf32>
    %16 = vector.shape_cast %15 : vector<1x16x16x4xf32> to vector<16x16x4xf32>
    %17 = vector.shape_cast %16 : vector<16x16x4xf32> to vector<256x4xf32>
    %c0_21 = arith.constant 0 : index
    %c2_22 = arith.constant 2 : index
    %c0_23 = arith.constant 0 : index
    %c0_24 = arith.constant 0 : index
    %18 = vector.load %arg1[%c0_21, %c2_22, %c0_23, %c0_24] : memref<1x18x18x4xf32, #tpu.memory_space<vmem>>, vector<1x16x16x4xf32>
    %19 = vector.shape_cast %18 : vector<1x16x16x4xf32> to vector<16x16x4xf32>
    %20 = vector.shape_cast %19 : vector<16x16x4xf32> to vector<256x4xf32>
    %c0_25 = arith.constant 0 : index
    %c2_26 = arith.constant 2 : index
    %c1_27 = arith.constant 1 : index
    %c0_28 = arith.constant 0 : index
    %21 = vector.load %arg1[%c0_25, %c2_26, %c1_27, %c0_28] : memref<1x18x18x4xf32, #tpu.memory_space<vmem>>, vector<1x16x16x4xf32>
    %22 = vector.shape_cast %21 : vector<1x16x16x4xf32> to vector<16x16x4xf32>
    %23 = vector.shape_cast %22 : vector<16x16x4xf32> to vector<256x4xf32>
    %c0_29 = arith.constant 0 : index
    %c2_30 = arith.constant 2 : index
    %c2_31 = arith.constant 2 : index
    %c0_32 = arith.constant 0 : index
    %24 = vector.load %arg1[%c0_29, %c2_30, %c2_31, %c0_32] : memref<1x18x18x4xf32, #tpu.memory_space<vmem>>, vector<1x16x16x4xf32>
    %25 = vector.shape_cast %24 : vector<1x16x16x4xf32> to vector<16x16x4xf32>
    %26 = vector.shape_cast %25 : vector<16x16x4xf32> to vector<256x4xf32>
    %27 = tpu.concatenate %2, %5, %8, %11, %14, %17, %20, %23, %26 in 1 : vector<256x4xf32>, vector<256x4xf32>, vector<256x4xf32>, vector<256x4xf32>, vector<256x4xf32>, vector<256x4xf32>, vector<256x4xf32>, vector<256x4xf32>, vector<256x4xf32> -> vector<256x36xf32>
    %c0_33 = arith.constant 0 : index
    %c0_34 = arith.constant 0 : index
    %28 = vector.load %arg2[%c0_33, %c0_34] : memref<36x128xf32, #tpu.memory_space<vmem>>, vector<36x128xf32>
    %cst = arith.constant dense<0.000000e+00> : vector<256x128xf32>
    %29 = tpu.matmul %27, %28, %cst {dimension_numbers = #tpu.dot_dimension_numbers<[1], [0], [0], [1], [0, 0, 1, 1], [], []>} : vector<256x36xf32>, vector<36x128xf32>, vector<256x128xf32> -> vector<256x128xf32>
    %c0_35 = arith.constant 0 : index
    %c0_36 = arith.constant 0 : index
    %30 = vector.load %arg3[%c0_35, %c0_36] : memref<1x128xf32, #tpu.memory_space<vmem>>, vector<1x128xf32>
    %31 = vector.broadcast %30 : vector<1x128xf32> to vector<256x128xf32>
    %32 = arith.addf %29, %31 : vector<256x128xf32>
    %33 = vector.shape_cast %32 : vector<256x128xf32> to vector<1x16x16x128xf32>
    %c0_37 = arith.constant 0 : index
    %c0_38 = arith.constant 0 : index
    %c0_39 = arith.constant 0 : index
    %c0_40 = arith.constant 0 : index
    %34 = vector.load %arg4[%c0_37, %c0_38, %c0_39, %c0_40] : memref<1x16x16x128xf32, #tpu.memory_space<vmem>>, vector<1x16x16x128xf32>
    tpu.vector_store %arg4[%c0_37, %c0_38, %c0_39, %c0_40], %33 {strides = array<i32>} : memref<1x16x16x128xf32, #tpu.memory_space<vmem>>, vector<1x16x16x128xf32>,
    return
  }
  func.func @transform_0(%arg0: i32) -> (i32, i32, i32, i32) {
    %c0_i32 = arith.constant 0 : i32
    %c0_i32_0 = arith.constant 0 : i32
    %c0_i32_1 = arith.constant 0 : i32
    %c0_i32_2 = arith.constant 0 : i32
    return %arg0, %c0_i32, %c0_i32_0, %c0_i32_1 : i32, i32, i32, i32
  }
  func.func @transform_1(%arg0: i32) -> (i32, i32) {
    %c0_i32 = arith.constant 0 : i32
    %c0_i32_0 = arith.constant 0 : i32
    %c0_i32_1 = arith.constant 0 : i32
    return %c0_i32, %c0_i32_0 : i32, i32
  }
  func.func @transform_2(%arg0: i32) -> (i32, i32) {
    %c0_i32 = arith.constant 0 : i32
    %c0_i32_0 = arith.constant 0 : i32
    %c0_i32_1 = arith.constant 0 : i32
    return %c0_i32, %c0_i32_0 : i32, i32
  }
  func.func @transform_3(%arg0: i32) -> (i32, i32, i32, i32) {
    %c0_i32 = arith.constant 0 : i32
    %c0_i32_0 = arith.constant 0 : i32
    %c0_i32_1 = arith.constant 0 : i32
    %c0_i32_2 = arith.constant 0 : i32
    return %arg0, %c0_i32, %c0_i32_0, %c0_i32_1 : i32, i32, i32, i32
  }
}

</mosaic_0001>

<llo_original>
// kernel: tpu_custom_call.1
$region0: #{tpu_custom_call.1}
  #allocation0 [shape = 'u32[]', space=smem, size = 0x4, offset = 0x4, fixed_abs, tag = 'smem constant byte address 0x4 - core index']
  #allocation1 [shape = 'u32[144,128]{1,0:T(1,128)}', space=vmem, size = 0x12000, scoped, tag = 'internal scratch']
  %s0 = inlined_call_operand.vmem [shape: f32[2,18,18,4], index: 0, kind: input, shape index: {}]
  %s1 = inlined_call_operand.vmem [shape: f32[36,128], index: 1, kind: input, shape index: {}]
  %s2 = inlined_call_operand.vmem [shape: f32[1,128], index: 2, kind: input, shape index: {}]
  %s3 = inlined_call_operand.hbm [shape: f32[2,16,16,128], index: 3, kind: output, shape index: {}]
  %s4 = sld [smem:[#allocation0]]
  $region45: #{tpu_custom_call.1} parent=0
    _
  %s6 = ssub.s32 1, %s4
  %s7 = scalar_select 0, %s6, %s4
  $region1: #{tpu_custom_call.1} parent=0
    #allocation2 [shape = 'u8[262144]{0}', space=vmem, size = 0x40000, scoped, tag = 'output window, operand 0']
    #allocation3 [shape = 's32[2]{0}', space=sflag, size = 0x8, scoped, tag = 'scoped memory for tpu_custom_call.1']
    %8 = vsyncpa [#allocation3], 0
    %s9 = scalar_lea.sflag [#allocation3], 1
    %10 = vsyncpa %s9, 0
    loop: start=0, step=1, limit=4
    $region2: #{tpu_custom_call.1} parent=1 // loop_pre_header
      _
    $region3: #{tpu_custom_call.1} parent=1 // loop_header
      %s12 = sphi 0, %s16
      %p13 = scmp.ge.s32.totalorder %s12, 4
      %s22 = sphi 0, %s24
      %s25 = sphi 0, %s22
      %s26 = sphi 0, %s25
      %s42 = sphi 0, %s26
      %s46 = sphi 0, %s46
      %s48 = sphi 0, %s46
      %s49 = sphi 0, %s48
      %s63 = sphi 0, %s49
      %s67 = sphi 0, %s67
      %s69 = sphi 0, %s67
      %s70 = sphi 0, %s69
      %s84 = sphi 0, %s70
      %s90 = sphi 0, %s92
      %s93 = sphi 0, %s90
      %s94 = sphi 0, %s93
      %s110 = sphi 0, %s94
    $region4: #{tpu_custom_call.1} parent=1 // loop_header_branch
      %15 = sbr.rel (%p13) target = $region8
    $region5: #{tpu_custom_call.1} parent=1 // loop_body
      %s17 = ssub.s32 %s12, 1
      %s18 = ssub.s32 %s12, 2
      %s19 = sadd.s32 %s12, 1
      %s20 = ssub.s32 %s12, %s19
      %p21 = scmp.eq.s32.totalorder %s20, 0
      %s23 = sadd.s32 %s22, 1
      %s24 = scalar_select %p21, %s22, %s23
      %p27 = pneg %p21
      %p28 = scmp.eq.s32.totalorder %s12, 1
      %p29 = por %p27, %p28
      %p30 = scmp.ne.s32.totalorder %s22, %s25
      %p31 = scmp.eq.s32.totalorder %s12, 0
      %p32 = por %p30, %p31
      %p33 = scmp.ne.s32.totalorder %s22, %s25
      %p34 = scmp.eq.s32.totalorder %s17, 1
      %p35 = por %p33, %p34
      %p36 = scmp.ne.s32.totalorder %s25, %s26
      %p37 = scmp.eq.s32.totalorder %s17, 0
      %p38 = por %p36, %p37
      %p39 = scmp.ne.s32.totalorder %s25, %s26
      %p40 = scmp.eq.s32.totalorder %s18, 1
      %p41 = por %p39, %p40
      %p43 = scmp.ne.s32.totalorder %s26, %s42
      %p44 = scmp.eq.s32.totalorder %s18, 0
      %p45 = por %p43, %p44
      %s47 = sadd.s32 %s46, 1
      %p50 = scmp.eq.s32.totalorder %s12, 1
      %p51 = scmp.ne.s32.totalorder %s46, %s48
      %p52 = scmp.eq.s32.totalorder %s12, 0
      %p53 = por %p51, %p52
      %p54 = scmp.ne.s32.totalorder %s46, %s48
      %p55 = scmp.eq.s32.totalorder %s17, 1
      %p56 = por %p54, %p55
      %p57 = scmp.ne.s32.totalorder %s48, %s49
      %p58 = scmp.eq.s32.totalorder %s17, 0
      %p59 = por %p57, %p58
      %p60 = scmp.ne.s32.totalorder %s48, %s49
      %p61 = scmp.eq.s32.totalorder %s18, 1
      %p62 = por %p60, %p61
      %p64 = scmp.ne.s32.totalorder %s49, %s63
      %p65 = scmp.eq.s32.totalorder %s18, 0
      %p66 = por %p64, %p65
      %s68 = sadd.s32 %s67, 1
      %p71 = scmp.eq.s32.totalorder %s12, 1
      %p72 = scmp.ne.s32.totalorder %s67, %s69
      %p73 = scmp.eq.s32.totalorder %s12, 0
      %p74 = por %p72, %p73
      %p75 = scmp.ne.s32.totalorder %s67, %s69
      %p76 = scmp.eq.s32.totalorder %s17, 1
      %p77 = por %p75, %p76
      %p78 = scmp.ne.s32.totalorder %s69, %s70
      %p79 = scmp.eq.s32.totalorder %s17, 0
      %p80 = por %p78, %p79
      %p81 = scmp.ne.s32.totalorder %s69, %s70
      %p82 = scmp.eq.s32.totalorder %s18, 1
      %p83 = por %p81, %p82
      %p85 = scmp.ne.s32.totalorder %s70, %s84
      %p86 = scmp.eq.s32.totalorder %s18, 0
      %p87 = por %p85, %p86
      %s88 = ssub.s32 %s12, %s19
      %p89 = scmp.eq.s32.totalorder %s88, 0
      %s91 = sadd.s32 %s90, 1
      %s92 = scalar_select %p89, %s90, %s91
      %p95 = pneg %p89
      %p96 = scmp.eq.s32.totalorder %s12, 1
      %p97 = por %p95, %p96
      %p98 = scmp.ne.s32.totalorder %s90, %s93
      %p99 = scmp.eq.s32.totalorder %s12, 0
      %p100 = por %p98, %p99
      %p101 = scmp.ne.s32.totalorder %s90, %s93
      %p102 = scmp.eq.s32.totalorder %s17, 1
      %p103 = por %p101, %p102
      %p104 = scmp.ne.s32.totalorder %s93, %s94
      %p105 = scmp.eq.s32.totalorder %s17, 0
      %p106 = por %p104, %p105
      %p107 = scmp.ne.s32.totalorder %s93, %s94
      %p108 = scmp.eq.s32.totalorder %s18, 1
      %p109 = por %p107, %p108
      %p111 = scmp.ne.s32.totalorder %s94, %s110
      %p112 = scmp.eq.s32.totalorder %s18, 0
      %p113 = por %p111, %p112
      %p114 = scmp.le.s32.totalorder 1, %s12
      %p115 = scmp.lt.s32.totalorder %s12, 3
      %p116 = pnand %p114, %p115
      %p117 = pneg %p116
      // Predicated region
      $region9: #{tpu_custom_call.1} parent=5 // pred_check
        _
      $region10: #{tpu_custom_call.1} parent=5 // pred_check_branch
        %119 = sbr.rel (%p116) target = $region12
      $region11: #{tpu_custom_call.1} parent=5 // pred_region
        %s120 = ssub.s32 %s12, 1
        // Predicated region
        $region13: #{tpu_custom_call.1} parent=11 // pred_check
          %p121 = pneg %p59
        $region14: #{tpu_custom_call.1} parent=11 // pred_check_branch
          %123 = sbr.rel (%p121) target = $region16
        $region15: #{tpu_custom_call.1} parent=11 // pred_region
          _
        $region16: #{tpu_custom_call.1} parent=11 // pred_fallthru
          _
        // Predicated region
        $region17: #{tpu_custom_call.1} parent=11 // pred_check
          %p124 = pneg %p80
        $region18: #{tpu_custom_call.1} parent=11 // pred_check_branch
          %126 = sbr.rel (%p124) target = $region20
        $region19: #{tpu_custom_call.1} parent=11 // pred_region
          _
        $region20: #{tpu_custom_call.1} parent=11 // pred_fallthru
          _
      $region12: #{tpu_custom_call.1} parent=5 // pred_fallthru
        _
      %p127 = scmp.lt.s32.totalorder %s12, 2
      // Predicated region
      $region21: #{tpu_custom_call.1} parent=5 // pred_check
        %p128 = pneg %p127
      $region22: #{tpu_custom_call.1} parent=5 // pred_check_branch
        %130 = sbr.rel (%p128) target = $region24
      $region23: #{tpu_custom_call.1} parent=5 // pred_region
        // Predicated region
        $region25: #{tpu_custom_call.1} parent=23 // pred_check
          %p131 = pneg %p32
        $region26: #{tpu_custom_call.1} parent=23 // pred_check_branch
          %133 = sbr.rel (%p131) target = $region28
        $region27: #{tpu_custom_call.1} parent=23 // pred_region
          %p134 = scmp.lt.s32.totalorder %s12, 1
          %s135 = scalar_select %p134, %s12, 1
          %s136 = smul.addr %s135, 54
          %s137 = smul.addr %s136, 8
          %s138 = scalar_lea.vmem %s0, %s137
        $region28: #{tpu_custom_call.1} parent=23 // pred_fallthru
          _
      $region24: #{tpu_custom_call.1} parent=5 // pred_fallthru
        _
      %p139 = scmp.le.s32.totalorder 1, %s12
      %p140 = scmp.lt.s32.totalorder %s12, 3
      %p141 = pnand %p139, %p140
      %p142 = pneg %p141
      // Predicated region
      $region29: #{tpu_custom_call.1} parent=5 // pred_check
        _
      $region30: #{tpu_custom_call.1} parent=5 // pred_check_branch
        %144 = sbr.rel (%p141) target = $region32
      $region31: #{tpu_custom_call.1} parent=5 // pred_region
        %s145 = ssub.s32 %s12, 1
        %p146 = scmp.lt.s32.totalorder %s17, 1
        %s147 = scalar_select %p146, %s17, 1
        %s148 = smul.addr %s147, 54
        %s149 = smul.addr %s148, 8
        %s150 = scalar_lea.vmem %s0, %s149
        %p151 = pneg %p38
        %p152 = pneg %p35
        %p153 = pneg %p59
        %p154 = pneg %p56
        %p155 = pneg %p80
        %p156 = pneg %p77
        %p157 = pneg %p106
        %p158 = pneg %p103
        %s159 = sand.u32 %s93, 1
        %s160 = scalar_lea.sflag [#allocation3], %s159
        %s161 = sand.u32 %s93, 1
        %s162 = smul.addr %s161, 256
        %s163 = scalar_lea.vmem [#allocation2], %s162
        %p164 = scmp.lt.s32.totalorder %s17, 1
        %s165 = scalar_select %p164, %s17, 1
        %s166 = smul.addr %s165, 54
        %s167 = smul.addr %s166, 8
        %s168 = scalar_lea.vmem %s0, %s167
        %v169 = vld [vmem:[%s168] sm:$0xff]
        %v170 = vld [vmem:[%s168 + $0x8] sm:$0xff]
        %v171 = vld [vmem:[%s168 + $0x18] sm:$0xff]
        %v172 = vld [vmem:[%s168 + $0x20] sm:$0xff]
        %v173 = vld [vmem:[%s168 + $0x30] sm:$0xff]
        %v174 = vld [vmem:[%s168 + $0x38] sm:$0xff]
        %v175 = vld [vmem:[%s168 + $0x48] sm:$0xff]
        %v176 = vld [vmem:[%s168 + $0x50] sm:$0xff]
        %v177 = vld [vmem:[%s168 + $0x60] sm:$0xff]
        %v178 = vld [vmem:[%s168 + $0x68] sm:$0xff]
        %v179 = vld [vmem:[%s168 + $0x78] sm:$0xff]
        %v180 = vld [vmem:[%s168 + $0x80] sm:$0xff]
        %v181 = vld [vmem:[%s168 + $0x90] sm:$0xff]
        %v182 = vld [vmem:[%s168 + $0x98] sm:$0xff]
        %v183 = vld [vmem:[%s168 + $0xa8] sm:$0xff]
        %v184 = vld [vmem:[%s168 + $0xb0] sm:$0xff]
        %v185 = vld [vmem:[%s168 + $0xc0] sm:$0xff]
        %v186 = vld [vmem:[%s168 + $0xc8] sm:$0xff]
        %v187 = vld [vmem:[%s168 + $0xd8] sm:$0xff]
        %v188 = vld [vmem:[%s168 + $0xe0] sm:$0xff]
        %v189 = vld [vmem:[%s168 + $0xf0] sm:$0xff]
        %v190 = vld [vmem:[%s168 + $0xf8] sm:$0xff]
        %v191 = vld [vmem:[%s168 + $0x108] sm:$0xff]
        %v192 = vld [vmem:[%s168 + $0x110] sm:$0xff]
        %v193 = vld [vmem:[%s168 + $0x120] sm:$0xff]
        %v194 = vld [vmem:[%s168 + $0x128] sm:$0xff]
        %v195 = vld [vmem:[%s168 + $0x138] sm:$0xff]
        %v196 = vld [vmem:[%s168 + $0x140] sm:$0xff]
        %v197 = vld [vmem:[%s168 + $0x150] sm:$0xff]
        %v198 = vld [vmem:[%s168 + $0x158] sm:$0xff]
        %v199 = vld [vmem:[%s168 + $0x168] sm:$0xff]
        %v200 = vld [vmem:[%s168 + $0x170] sm:$0xff]
        %v201 = vld [vmem:[%s168 + $0x1] sm:$0xff]
        %v202 = vld [vmem:[%s168 + $0x9] sm:$0xff]
        %v203 = vld [vmem:[%s168 + $0x19] sm:$0xff]
        %v204 = vld [vmem:[%s168 + $0x21] sm:$0xff]
        %v205 = vld [vmem:[%s168 + $0x31] sm:$0xff]
        %v206 = vld [vmem:[%s168 + $0x39] sm:$0xff]
        %v207 = vld [vmem:[%s168 + $0x49] sm:$0xff]
        %v208 = vld [vmem:[%s168 + $0x51] sm:$0xff]
        %v209 = vld [vmem:[%s168 + $0x61] sm:$0xff]
        %v210 = vld [vmem:[%s168 + $0x69] sm:$0xff]
        %v211 = vld [vmem:[%s168 + $0x79] sm:$0xff]
        %v212 = vld [vmem:[%s168 + $0x81] sm:$0xff]
        %v213 = vld [vmem:[%s168 + $0x91] sm:$0xff]
        %v214 = vld [vmem:[%s168 + $0x99] sm:$0xff]
        %v215 = vld [vmem:[%s168 + $0xa9] sm:$0xff]
        %v216 = vld [vmem:[%s168 + $0xb1] sm:$0xff]
        %v217 = vld [vmem:[%s168 + $0xc1] sm:$0xff]
        %v218 = vld [vmem:[%s168 + $0xc9] sm:$0xff]
        %v219 = vld [vmem:[%s168 + $0xd9] sm:$0xff]
        %v220 = vld [vmem:[%s168 + $0xe1] sm:$0xff]
        %v221 = vld [vmem:[%s168 + $0xf1] sm:$0xff]
        %v222 = vld [vmem:[%s168 + $0xf9] sm:$0xff]
        %v223 = vld [vmem:[%s168 + $0x109] sm:$0xff]
        %v224 = vld [vmem:[%s168 + $0x111] sm:$0xff]
        %v225 = vld [vmem:[%s168 + $0x121] sm:$0xff]
        %v226 = vld [vmem:[%s168 + $0x129] sm:$0xff]
        %v227 = vld [vmem:[%s168 + $0x139] sm:$0xff]
        %v228 = vld [vmem:[%s168 + $0x141] sm:$0xff]
        %v229 = vld [vmem:[%s168 + $0x151] sm:$0xff]
        %v230 = vld [vmem:[%s168 + $0x159] sm:$0xff]
        %v231 = vld [vmem:[%s168 + $0x169] sm:$0xff]
        %v232 = vld [vmem:[%s168 + $0x171] sm:$0xff]
        %v233 = vld [vmem:[%s168 + $0x2] sm:$0xff]
        %v234 = vld [vmem:[%s168 + $0xa] sm:$0xff]
        %v235 = vld [vmem:[%s168 + $0x1a] sm:$0xff]
        %v236 = vld [vmem:[%s168 + $0x22] sm:$0xff]
        %v237 = vld [vmem:[%s168 + $0x32] sm:$0xff]
        %v238 = vld [vmem:[%s168 + $0x3a] sm:$0xff]
        %v239 = vld [vmem:[%s168 + $0x4a] sm:$0xff]
        %v240 = vld [vmem:[%s168 + $0x52] sm:$0xff]
        %v241 = vld [vmem:[%s168 + $0x62] sm:$0xff]
        %v242 = vld [vmem:[%s168 + $0x6a] sm:$0xff]
        %v243 = vld [vmem:[%s168 + $0x7a] sm:$0xff]
        %v244 = vld [vmem:[%s168 + $0x82] sm:$0xff]
        %v245 = vld [vmem:[%s168 + $0x92] sm:$0xff]
        %v246 = vld [vmem:[%s168 + $0x9a] sm:$0xff]
        %v247 = vld [vmem:[%s168 + $0xaa] sm:$0xff]
        %v248 = vld [vmem:[%s168 + $0xb2] sm:$0xff]
        %v249 = vld [vmem:[%s168 + $0xc2] sm:$0xff]
        %v250 = vld [vmem:[%s168 + $0xca] sm:$0xff]
        %v251 = vld [vmem:[%s168 + $0xda] sm:$0xff]
        %v252 = vld [vmem:[%s168 + $0xe2] sm:$0xff]
        %v253 = vld [vmem:[%s168 + $0xf2] sm:$0xff]
        %v254 = vld [vmem:[%s168 + $0xfa] sm:$0xff]
        %v255 = vld [vmem:[%s168 + $0x10a] sm:$0xff]
        %v256 = vld [vmem:[%s168 + $0x112] sm:$0xff]
        %v257 = vld [vmem:[%s168 + $0x122] sm:$0xff]
        %v258 = vld [vmem:[%s168 + $0x12a] sm:$0xff]
        %v259 = vld [vmem:[%s168 + $0x13a] sm:$0xff]
        %v260 = vld [vmem:[%s168 + $0x142] sm:$0xff]
        %v261 = vld [vmem:[%s168 + $0x152] sm:$0xff]
        %v262 = vld [vmem:[%s168 + $0x15a] sm:$0xff]
        %v263 = vld [vmem:[%s168 + $0x16a] sm:$0xff]
        %v264 = vld [vmem:[%s168 + $0x172] sm:$0xff]
        %s265 = scalar_lea.vmem %s168, 24
        %v266 = vld [vmem:[%s265] sm:$0xff]
        %v267 = vld [vmem:[%s265 + $0x8] sm:$0xff]
        %v268 = vld [vmem:[%s265 + $0x18] sm:$0xff]
        %v269 = vld [vmem:[%s265 + $0x20] sm:$0xff]
        %v270 = vld [vmem:[%s265 + $0x30] sm:$0xff]
        %v271 = vld [vmem:[%s265 + $0x38] sm:$0xff]
        %v272 = vld [vmem:[%s265 + $0x48] sm:$0xff]
        %v273 = vld [vmem:[%s265 + $0x50] sm:$0xff]
        %v274 = vld [vmem:[%s265 + $0x60] sm:$0xff]
        %v275 = vld [vmem:[%s265 + $0x68] sm:$0xff]
        %v276 = vld [vmem:[%s265 + $0x78] sm:$0xff]
        %v277 = vld [vmem:[%s265 + $0x80] sm:$0xff]
        %v278 = vld [vmem:[%s265 + $0x90] sm:$0xff]
        %v279 = vld [vmem:[%s265 + $0x98] sm:$0xff]
        %v280 = vld [vmem:[%s265 + $0xa8] sm:$0xff]
        %v281 = vld [vmem:[%s265 + $0xb0] sm:$0xff]
        %v282 = vld [vmem:[%s265 + $0xc0] sm:$0xff]
        %v283 = vld [vmem:[%s265 + $0xc8] sm:$0xff]
        %v284 = vld [vmem:[%s265 + $0xd8] sm:$0xff]
        %v285 = vld [vmem:[%s265 + $0xe0] sm:$0xff]
        %v286 = vld [vmem:[%s265 + $0xf0] sm:$0xff]
        %v287 = vld [vmem:[%s265 + $0xf8] sm:$0xff]
        %v288 = vld [vmem:[%s265 + $0x108] sm:$0xff]
        %v289 = vld [vmem:[%s265 + $0x110] sm:$0xff]
        %v290 = vld [vmem:[%s265 + $0x120] sm:$0xff]
        %v291 = vld [vmem:[%s265 + $0x128] sm:$0xff]
        %v292 = vld [vmem:[%s265 + $0x138] sm:$0xff]
        %v293 = vld [vmem:[%s265 + $0x140] sm:$0xff]
        %v294 = vld [vmem:[%s265 + $0x150] sm:$0xff]
        %v295 = vld [vmem:[%s265 + $0x158] sm:$0xff]
        %v296 = vld [vmem:[%s265 + $0x168] sm:$0xff]
        %v297 = vld [vmem:[%s265 + $0x170] sm:$0xff]
        %v298 = vld [vmem:[%s265 + $0x1] sm:$0xff]
        %v299 = vld [vmem:[%s265 + $0x9] sm:$0xff]
        %v300 = vld [vmem:[%s265 + $0x19] sm:$0xff]
        %v301 = vld [vmem:[%s265 + $0x21] sm:$0xff]
        %v302 = vld [vmem:[%s265 + $0x31] sm:$0xff]
        %v303 = vld [vmem:[%s265 + $0x39] sm:$0xff]
        %v304 = vld [vmem:[%s265 + $0x49] sm:$0xff]
        %v305 = vld [vmem:[%s265 + $0x51] sm:$0xff]
        %v306 = vld [vmem:[%s265 + $0x61] sm:$0xff]
        %v307 = vld [vmem:[%s265 + $0x69] sm:$0xff]
        %v308 = vld [vmem:[%s265 + $0x79] sm:$0xff]
        %v309 = vld [vmem:[%s265 + $0x81] sm:$0xff]
        %v310 = vld [vmem:[%s265 + $0x91] sm:$0xff]
        %v311 = vld [vmem:[%s265 + $0x99] sm:$0xff]
        %v312 = vld [vmem:[%s265 + $0xa9] sm:$0xff]
        %v313 = vld [vmem:[%s265 + $0xb1] sm:$0xff]
        %v314 = vld [vmem:[%s265 + $0xc1] sm:$0xff]
        %v315 = vld [vmem:[%s265 + $0xc9] sm:$0xff]
        %v316 = vld [vmem:[%s265 + $0xd9] sm:$0xff]
        %v317 = vld [vmem:[%s265 + $0xe1] sm:$0xff]
        %v318 = vld [vmem:[%s265 + $0xf1] sm:$0xff]
        %v319 = vld [vmem:[%s265 + $0xf9] sm:$0xff]
        %v320 = vld [vmem:[%s265 + $0x109] sm:$0xff]
        %v321 = vld [vmem:[%s265 + $0x111] sm:$0xff]
        %v322 = vld [vmem:[%s265 + $0x121] sm:$0xff]
        %v323 = vld [vmem:[%s265 + $0x129] sm:$0xff]
        %v324 = vld [vmem:[%s265 + $0x139] sm:$0xff]
        %v325 = vld [vmem:[%s265 + $0x141] sm:$0xff]
        %v326 = vld [vmem:[%s265 + $0x151] sm:$0xff]
        %v327 = vld [vmem:[%s265 + $0x159] sm:$0xff]
        %v328 = vld [vmem:[%s265 + $0x169] sm:$0xff]
        %v329 = vld [vmem:[%s265 + $0x171] sm:$0xff]
        %v330 = vld [vmem:[%s265 + $0x2] sm:$0xff]
        %v331 = vld [vmem:[%s265 + $0xa] sm:$0xff]
        %v332 = vld [vmem:[%s265 + $0x1a] sm:$0xff]
        %v333 = vld [vmem:[%s265 + $0x22] sm:$0xff]
        %v334 = vld [vmem:[%s265 + $0x32] sm:$0xff]
        %v335 = vld [vmem:[%s265 + $0x3a] sm:$0xff]
        %v336 = vld [vmem:[%s265 + $0x4a] sm:$0xff]
        %v337 = vld [vmem:[%s265 + $0x52] sm:$0xff]
        %v338 = vld [vmem:[%s265 + $0x62] sm:$0xff]
        %v339 = vld [vmem:[%s265 + $0x6a] sm:$0xff]
        %v340 = vld [vmem:[%s265 + $0x7a] sm:$0xff]
        %v341 = vld [vmem:[%s265 + $0x82] sm:$0xff]
        %v342 = vld [vmem:[%s265 + $0x92] sm:$0xff]
        %v343 = vld [vmem:[%s265 + $0x9a] sm:$0xff]
        %v344 = vld [vmem:[%s265 + $0xaa] sm:$0xff]
        %v345 = vld [vmem:[%s265 + $0xb2] sm:$0xff]
        %v346 = vld [vmem:[%s265 + $0xc2] sm:$0xff]
        %v347 = vld [vmem:[%s265 + $0xca] sm:$0xff]
        %v348 = vld [vmem:[%s265 + $0xda] sm:$0xff]
        %v349 = vld [vmem:[%s265 + $0xe2] sm:$0xff]
        %v350 = vld [vmem:[%s265 + $0xf2] sm:$0xff]
        %v351 = vld [vmem:[%s265 + $0xfa] sm:$0xff]
        %v352 = vld [vmem:[%s265 + $0x10a] sm:$0xff]
        %v353 = vld [vmem:[%s265 + $0x112] sm:$0xff]
        %v354 = vld [vmem:[%s265 + $0x122] sm:$0xff]
        %v355 = vld [vmem:[%s265 + $0x12a] sm:$0xff]
        %v356 = vld [vmem:[%s265 + $0x13a] sm:$0xff]
        %v357 = vld [vmem:[%s265 + $0x142] sm:$0xff]
        %v358 = vld [vmem:[%s265 + $0x152] sm:$0xff]
        %v359 = vld [vmem:[%s265 + $0x15a] sm:$0xff]
        %v360 = vld [vmem:[%s265 + $0x16a] sm:$0xff]
        %v361 = vld [vmem:[%s265 + $0x172] sm:$0xff]
        %s362 = scalar_lea.vmem %s168, 48
        %v363 = vld [vmem:[%s362] sm:$0xff]
        %v364 = vld [vmem:[%s362 + $0x8] sm:$0xff]
        %v365 = vld [vmem:[%s362 + $0x18] sm:$0xff]
        %v366 = vld [vmem:[%s362 + $0x20] sm:$0xff]
        %v367 = vld [vmem:[%s362 + $0x30] sm:$0xff]
        %v368 = vld [vmem:[%s362 + $0x38] sm:$0xff]
        %v369 = vld [vmem:[%s362 + $0x48] sm:$0xff]
        %v370 = vld [vmem:[%s362 + $0x50] sm:$0xff]
        %v371 = vld [vmem:[%s362 + $0x60] sm:$0xff]
        %v372 = vld [vmem:[%s362 + $0x68] sm:$0xff]
        %v373 = vld [vmem:[%s362 + $0x78] sm:$0xff]
        %v374 = vld [vmem:[%s362 + $0x80] sm:$0xff]
        %v375 = vld [vmem:[%s362 + $0x90] sm:$0xff]
        %v376 = vld [vmem:[%s362 + $0x98] sm:$0xff]
        %v377 = vld [vmem:[%s362 + $0xa8] sm:$0xff]
        %v378 = vld [vmem:[%s362 + $0xb0] sm:$0xff]
        %v379 = vld [vmem:[%s362 + $0xc0] sm:$0xff]
        %v380 = vld [vmem:[%s362 + $0xc8] sm:$0xff]
        %v381 = vld [vmem:[%s362 + $0xd8] sm:$0xff]
        %v382 = vld [vmem:[%s362 + $0xe0] sm:$0xff]
        %v383 = vld [vmem:[%s362 + $0xf0] sm:$0xff]
        %v384 = vld [vmem:[%s362 + $0xf8] sm:$0xff]
        %v385 = vld [vmem:[%s362 + $0x108] sm:$0xff]
        %v386 = vld [vmem:[%s362 + $0x110] sm:$0xff]
        %v387 = vld [vmem:[%s362 + $0x120] sm:$0xff]
        %v388 = vld [vmem:[%s362 + $0x128] sm:$0xff]
        %v389 = vld [vmem:[%s362 + $0x138] sm:$0xff]
        %v390 = vld [vmem:[%s362 + $0x140] sm:$0xff]
        %v391 = vld [vmem:[%s362 + $0x150] sm:$0xff]
        %v392 = vld [vmem:[%s362 + $0x158] sm:$0xff]
        %v393 = vld [vmem:[%s362 + $0x168] sm:$0xff]
        %v394 = vld [vmem:[%s362 + $0x170] sm:$0xff]
        %v395 = vld [vmem:[%s362 + $0x1] sm:$0xff]
        %v396 = vld [vmem:[%s362 + $0x9] sm:$0xff]
        %v397 = vld [vmem:[%s362 + $0x19] sm:$0xff]
        %v398 = vld [vmem:[%s362 + $0x21] sm:$0xff]
        %v399 = vld [vmem:[%s362 + $0x31] sm:$0xff]
        %v400 = vld [vmem:[%s362 + $0x39] sm:$0xff]
        %v401 = vld [vmem:[%s362 + $0x49] sm:$0xff]
        %v402 = vld [vmem:[%s362 + $0x51] sm:$0xff]
        %v403 = vld [vmem:[%s362 + $0x61] sm:$0xff]
        %v404 = vld [vmem:[%s362 + $0x69] sm:$0xff]
        %v405 = vld [vmem:[%s362 + $0x79] sm:$0xff]
        %v406 = vld [vmem:[%s362 + $0x81] sm:$0xff]
        %v407 = vld [vmem:[%s362 + $0x91] sm:$0xff]
        %v408 = vld [vmem:[%s362 + $0x99] sm:$0xff]
        %v409 = vld [vmem:[%s362 + $0xa9] sm:$0xff]
        %v410 = vld [vmem:[%s362 + $0xb1] sm:$0xff]
        %v411 = vld [vmem:[%s362 + $0xc1] sm:$0xff]
        %v412 = vld [vmem:[%s362 + $0xc9] sm:$0xff]
        %v413 = vld [vmem:[%s362 + $0xd9] sm:$0xff]
        %v414 = vld [vmem:[%s362 + $0xe1] sm:$0xff]
        %v415 = vld [vmem:[%s362 + $0xf1] sm:$0xff]
        %v416 = vld [vmem:[%s362 + $0xf9] sm:$0xff]
        %v417 = vld [vmem:[%s362 + $0x109] sm:$0xff]
        %v418 = vld [vmem:[%s362 + $0x111] sm:$0xff]
        %v419 = vld [vmem:[%s362 + $0x121] sm:$0xff]
        %v420 = vld [vmem:[%s362 + $0x129] sm:$0xff]
        %v421 = vld [vmem:[%s362 + $0x139] sm:$0xff]
        %v422 = vld [vmem:[%s362 + $0x141] sm:$0xff]
        %v423 = vld [vmem:[%s362 + $0x151] sm:$0xff]
        %v424 = vld [vmem:[%s362 + $0x159] sm:$0xff]
        %v425 = vld [vmem:[%s362 + $0x169] sm:$0xff]
        %v426 = vld [vmem:[%s362 + $0x171] sm:$0xff]
        %v427 = vld [vmem:[%s362 + $0x2] sm:$0xff]
        %v428 = vld [vmem:[%s362 + $0xa] sm:$0xff]
        %v429 = vld [vmem:[%s362 + $0x1a] sm:$0xff]
        %v430 = vld [vmem:[%s362 + $0x22] sm:$0xff]
        %v431 = vld [vmem:[%s362 + $0x32] sm:$0xff]
        %v432 = vld [vmem:[%s362 + $0x3a] sm:$0xff]
        %v433 = vld [vmem:[%s362 + $0x4a] sm:$0xff]
        %v434 = vld [vmem:[%s362 + $0x52] sm:$0xff]
        %v435 = vld [vmem:[%s362 + $0x62] sm:$0xff]
        %v436 = vld [vmem:[%s362 + $0x6a] sm:$0xff]
        %v437 = vld [vmem:[%s362 + $0x7a] sm:$0xff]
        %v438 = vld [vmem:[%s362 + $0x82] sm:$0xff]
        %v439 = vld [vmem:[%s362 + $0x92] sm:$0xff]
        %v440 = vld [vmem:[%s362 + $0x9a] sm:$0xff]
        %v441 = vld [vmem:[%s362 + $0xaa] sm:$0xff]
        %v442 = vld [vmem:[%s362 + $0xb2] sm:$0xff]
        %v443 = vld [vmem:[%s362 + $0xc2] sm:$0xff]
        %v444 = vld [vmem:[%s362 + $0xca] sm:$0xff]
        %v445 = vld [vmem:[%s362 + $0xda] sm:$0xff]
        %v446 = vld [vmem:[%s362 + $0xe2] sm:$0xff]
        %v447 = vld [vmem:[%s362 + $0xf2] sm:$0xff]
        %v448 = vld [vmem:[%s362 + $0xfa] sm:$0xff]
        %v449 = vld [vmem:[%s362 + $0x10a] sm:$0xff]
        %v450 = vld [vmem:[%s362 + $0x112] sm:$0xff]
        %v451 = vld [vmem:[%s362 + $0x122] sm:$0xff]
        %v452 = vld [vmem:[%s362 + $0x12a] sm:$0xff]
        %v453 = vld [vmem:[%s362 + $0x13a] sm:$0xff]
        %v454 = vld [vmem:[%s362 + $0x142] sm:$0xff]
        %v455 = vld [vmem:[%s362 + $0x152] sm:$0xff]
        %v456 = vld [vmem:[%s362 + $0x15a] sm:$0xff]
        %v457 = vld [vmem:[%s362 + $0x16a] sm:$0xff]
        %v458 = vld [vmem:[%s362 + $0x172] sm:$0xff]
        %491 = vrot.lane.b32.xlu0 %v201, 4
        %v492 = vpop.permute.xlu0 %491
        %493 = vrot.lane.b32.xlu0 %v202, 4
        %v494 = vpop.permute.xlu0 %493
        %495 = vrot.lane.b32.xlu0 %v203, 4
        %v496 = vpop.permute.xlu0 %495
        %497 = vrot.lane.b32.xlu0 %v204, 4
        %v498 = vpop.permute.xlu0 %497
        %499 = vrot.lane.b32.xlu0 %v205, 4
        %v500 = vpop.permute.xlu0 %499
        %501 = vrot.lane.b32.xlu0 %v206, 4
        %v502 = vpop.permute.xlu0 %501
        %503 = vrot.lane.b32.xlu0 %v207, 4
        %v504 = vpop.permute.xlu0 %503
        %505 = vrot.lane.b32.xlu0 %v208, 4
        %v506 = vpop.permute.xlu0 %505
        %507 = vrot.lane.b32.xlu0 %v209, 4
        %v508 = vpop.permute.xlu0 %507
        %509 = vrot.lane.b32.xlu0 %v210, 4
        %v510 = vpop.permute.xlu0 %509
        %511 = vrot.lane.b32.xlu0 %v211, 4
        %v512 = vpop.permute.xlu0 %511
        %513 = vrot.lane.b32.xlu0 %v212, 4
        %v514 = vpop.permute.xlu0 %513
        %515 = vrot.lane.b32.xlu0 %v213, 4
        %v516 = vpop.permute.xlu0 %515
        %517 = vrot.lane.b32.xlu0 %v214, 4
        %v518 = vpop.permute.xlu0 %517
        %519 = vrot.lane.b32.xlu0 %v215, 4
        %v520 = vpop.permute.xlu0 %519
        %521 = vrot.lane.b32.xlu0 %v216, 4
        %v522 = vpop.permute.xlu0 %521
        %523 = vrot.lane.b32.xlu0 %v217, 4
        %v524 = vpop.permute.xlu0 %523
        %525 = vrot.lane.b32.xlu0 %v218, 4
        %v526 = vpop.permute.xlu0 %525
        %527 = vrot.lane.b32.xlu0 %v219, 4
        %v528 = vpop.permute.xlu0 %527
        %529 = vrot.lane.b32.xlu0 %v220, 4
        %v530 = vpop.permute.xlu0 %529
        %531 = vrot.lane.b32.xlu0 %v221, 4
        %v532 = vpop.permute.xlu0 %531
        %533 = vrot.lane.b32.xlu0 %v222, 4
        %v534 = vpop.permute.xlu0 %533
        %535 = vrot.lane.b32.xlu0 %v223, 4
        %v536 = vpop.permute.xlu0 %535
        %537 = vrot.lane.b32.xlu0 %v224, 4
        %v538 = vpop.permute.xlu0 %537
        %539 = vrot.lane.b32.xlu0 %v225, 4
        %v540 = vpop.permute.xlu0 %539
        %541 = vrot.lane.b32.xlu0 %v226, 4
        %v542 = vpop.permute.xlu0 %541
        %543 = vrot.lane.b32.xlu0 %v227, 4
        %v544 = vpop.permute.xlu0 %543
        %545 = vrot.lane.b32.xlu0 %v228, 4
        %v546 = vpop.permute.xlu0 %545
        %547 = vrot.lane.b32.xlu0 %v229, 4
        %v548 = vpop.permute.xlu0 %547
        %549 = vrot.lane.b32.xlu0 %v230, 4
        %v550 = vpop.permute.xlu0 %549
        %551 = vrot.lane.b32.xlu0 %v231, 4
        %v552 = vpop.permute.xlu0 %551
        %553 = vrot.lane.b32.xlu0 %v232, 4
        %v554 = vpop.permute.xlu0 %553
        %619 = vrot.lane.b32.xlu0 %v233, 8
        %v620 = vpop.permute.xlu0 %619
        %621 = vrot.lane.b32.xlu0 %v234, 8
        %v622 = vpop.permute.xlu0 %621
        %623 = vrot.lane.b32.xlu0 %v235, 8
        %v624 = vpop.permute.xlu0 %623
        %625 = vrot.lane.b32.xlu0 %v236, 8
        %v626 = vpop.permute.xlu0 %625
        %627 = vrot.lane.b32.xlu0 %v237, 8
        %v628 = vpop.permute.xlu0 %627
        %629 = vrot.lane.b32.xlu0 %v238, 8
        %v630 = vpop.permute.xlu0 %629
        %631 = vrot.lane.b32.xlu0 %v239, 8
        %v632 = vpop.permute.xlu0 %631
        %633 = vrot.lane.b32.xlu0 %v240, 8
        %v634 = vpop.permute.xlu0 %633
        %635 = vrot.lane.b32.xlu0 %v241, 8
        %v636 = vpop.permute.xlu0 %635
        %637 = vrot.lane.b32.xlu0 %v242, 8
        %v638 = vpop.permute.xlu0 %637
        %639 = vrot.lane.b32.xlu0 %v243, 8
        %v640 = vpop.permute.xlu0 %639
        %641 = vrot.lane.b32.xlu0 %v244, 8
        %v642 = vpop.permute.xlu0 %641
        %643 = vrot.lane.b32.xlu0 %v245, 8
        %v644 = vpop.permute.xlu0 %643
        %645 = vrot.lane.b32.xlu0 %v246, 8
        %v646 = vpop.permute.xlu0 %645
        %647 = vrot.lane.b32.xlu0 %v247, 8
        %v648 = vpop.permute.xlu0 %647
        %649 = vrot.lane.b32.xlu0 %v248, 8
        %v650 = vpop.permute.xlu0 %649
        %651 = vrot.lane.b32.xlu0 %v249, 8
        %v652 = vpop.permute.xlu0 %651
        %653 = vrot.lane.b32.xlu0 %v250, 8
        %v654 = vpop.permute.xlu0 %653
        %655 = vrot.lane.b32.xlu0 %v251, 8
        %v656 = vpop.permute.xlu0 %655
        %657 = vrot.lane.b32.xlu0 %v252, 8
        %v658 = vpop.permute.xlu0 %657
        %659 = vrot.lane.b32.xlu0 %v253, 8
        %v660 = vpop.permute.xlu0 %659
        %661 = vrot.lane.b32.xlu0 %v254, 8
        %v662 = vpop.permute.xlu0 %661
        %663 = vrot.lane.b32.xlu0 %v255, 8
        %v664 = vpop.permute.xlu0 %663
        %665 = vrot.lane.b32.xlu0 %v256, 8
        %v666 = vpop.permute.xlu0 %665
        %667 = vrot.lane.b32.xlu0 %v257, 8
        %v668 = vpop.permute.xlu0 %667
        %669 = vrot.lane.b32.xlu0 %v258, 8
        %v670 = vpop.permute.xlu0 %669
        %671 = vrot.lane.b32.xlu0 %v259, 8
        %v672 = vpop.permute.xlu0 %671
        %673 = vrot.lane.b32.xlu0 %v260, 8
        %v674 = vpop.permute.xlu0 %673
        %675 = vrot.lane.b32.xlu0 %v261, 8
        %v676 = vpop.permute.xlu0 %675
        %677 = vrot.lane.b32.xlu0 %v262, 8
        %v678 = vpop.permute.xlu0 %677
        %679 = vrot.lane.b32.xlu0 %v263, 8
        %v680 = vpop.permute.xlu0 %679
        %681 = vrot.lane.b32.xlu0 %v264, 8
        %v682 = vpop.permute.xlu0 %681
        %747 = vrot.lane.b32.xlu0 %v266, 12
        %v748 = vpop.permute.xlu0 %747
        %749 = vrot.lane.b32.xlu0 %v267, 12
        %v750 = vpop.permute.xlu0 %749
        %751 = vrot.lane.b32.xlu0 %v268, 12
        %v752 = vpop.permute.xlu0 %751
        %753 = vrot.lane.b32.xlu0 %v269, 12
        %v754 = vpop.permute.xlu0 %753
        %755 = vrot.lane.b32.xlu0 %v270, 12
        %v756 = vpop.permute.xlu0 %755
        %757 = vrot.lane.b32.xlu0 %v271, 12
        %v758 = vpop.permute.xlu0 %757
        %759 = vrot.lane.b32.xlu0 %v272, 12
        %v760 = vpop.permute.xlu0 %759
        %761 = vrot.lane.b32.xlu0 %v273, 12
        %v762 = vpop.permute.xlu0 %761
        %763 = vrot.lane.b32.xlu0 %v274, 12
        %v764 = vpop.permute.xlu0 %763
        %765 = vrot.lane.b32.xlu0 %v275, 12
        %v766 = vpop.permute.xlu0 %765
        %767 = vrot.lane.b32.xlu0 %v276, 12
        %v768 = vpop.permute.xlu0 %767
        %769 = vrot.lane.b32.xlu0 %v277, 12
        %v770 = vpop.permute.xlu0 %769
        %771 = vrot.lane.b32.xlu0 %v278, 12
        %v772 = vpop.permute.xlu0 %771
        %773 = vrot.lane.b32.xlu0 %v279, 12
        %v774 = vpop.permute.xlu0 %773
        %775 = vrot.lane.b32.xlu0 %v280, 12
        %v776 = vpop.permute.xlu0 %775
        %777 = vrot.lane.b32.xlu0 %v281, 12
        %v778 = vpop.permute.xlu0 %777
        %779 = vrot.lane.b32.xlu0 %v282, 12
        %v780 = vpop.permute.xlu0 %779
        %781 = vrot.lane.b32.xlu0 %v283, 12
        %v782 = vpop.permute.xlu0 %781
        %783 = vrot.lane.b32.xlu0 %v284, 12
        %v784 = vpop.permute.xlu0 %783
        %785 = vrot.lane.b32.xlu0 %v285, 12
        %v786 = vpop.permute.xlu0 %785
        %787 = vrot.lane.b32.xlu0 %v286, 12
        %v788 = vpop.permute.xlu0 %787
        %789 = vrot.lane.b32.xlu0 %v287, 12
        %v790 = vpop.permute.xlu0 %789
        %791 = vrot.lane.b32.xlu0 %v288, 12
        %v792 = vpop.permute.xlu0 %791
        %793 = vrot.lane.b32.xlu0 %v289, 12
        %v794 = vpop.permute.xlu0 %793
        %795 = vrot.lane.b32.xlu0 %v290, 12
        %v796 = vpop.permute.xlu0 %795
        %797 = vrot.lane.b32.xlu0 %v291, 12
        %v798 = vpop.permute.xlu0 %797
        %799 = vrot.lane.b32.xlu0 %v292, 12
        %v800 = vpop.permute.xlu0 %799
        %801 = vrot.lane.b32.xlu0 %v293, 12
        %v802 = vpop.permute.xlu0 %801
        %803 = vrot.lane.b32.xlu0 %v294, 12
        %v804 = vpop.permute.xlu0 %803
        %805 = vrot.lane.b32.xlu0 %v295, 12
        %v806 = vpop.permute.xlu0 %805
        %807 = vrot.lane.b32.xlu0 %v296, 12
        %v808 = vpop.permute.xlu0 %807
        %809 = vrot.lane.b32.xlu0 %v297, 12
        %v810 = vpop.permute.xlu0 %809
        %875 = vrot.lane.b32.xlu0 %v298, 16
        %v876 = vpop.permute.xlu0 %875
        %877 = vrot.lane.b32.xlu0 %v299, 16
        %v878 = vpop.permute.xlu0 %877
        %879 = vrot.lane.b32.xlu0 %v300, 16
        %v880 = vpop.permute.xlu0 %879
        %881 = vrot.lane.b32.xlu0 %v301, 16
        %v882 = vpop.permute.xlu0 %881
        %883 = vrot.lane.b32.xlu0 %v302, 16
        %v884 = vpop.permute.xlu0 %883
        %885 = vrot.lane.b32.xlu0 %v303, 16
        %v886 = vpop.permute.xlu0 %885
        %887 = vrot.lane.b32.xlu0 %v304, 16
        %v888 = vpop.permute.xlu0 %887
        %889 = vrot.lane.b32.xlu0 %v305, 16
        %v890 = vpop.permute.xlu0 %889
        %891 = vrot.lane.b32.xlu0 %v306, 16
        %v892 = vpop.permute.xlu0 %891
        %893 = vrot.lane.b32.xlu0 %v307, 16
        %v894 = vpop.permute.xlu0 %893
        %895 = vrot.lane.b32.xlu0 %v308, 16
        %v896 = vpop.permute.xlu0 %895
        %897 = vrot.lane.b32.xlu0 %v309, 16
        %v898 = vpop.permute.xlu0 %897
        %899 = vrot.lane.b32.xlu0 %v310, 16
        %v900 = vpop.permute.xlu0 %899
        %901 = vrot.lane.b32.xlu0 %v311, 16
        %v902 = vpop.permute.xlu0 %901
        %903 = vrot.lane.b32.xlu0 %v312, 16
        %v904 = vpop.permute.xlu0 %903
        %905 = vrot.lane.b32.xlu0 %v313, 16
        %v906 = vpop.permute.xlu0 %905
        %907 = vrot.lane.b32.xlu0 %v314, 16
        %v908 = vpop.permute.xlu0 %907
        %909 = vrot.lane.b32.xlu0 %v315, 16
        %v910 = vpop.permute.xlu0 %909
        %911 = vrot.lane.b32.xlu0 %v316, 16
        %v912 = vpop.permute.xlu0 %911
        %913 = vrot.lane.b32.xlu0 %v317, 16
        %v914 = vpop.permute.xlu0 %913
        %915 = vrot.lane.b32.xlu0 %v318, 16
        %v916 = vpop.permute.xlu0 %915
        %917 = vrot.lane.b32.xlu0 %v319, 16
        %v918 = vpop.permute.xlu0 %917
        %919 = vrot.lane.b32.xlu0 %v320, 16
        %v920 = vpop.permute.xlu0 %919
        %921 = vrot.lane.b32.xlu0 %v321, 16
        %v922 = vpop.permute.xlu0 %921
        %923 = vrot.lane.b32.xlu0 %v322, 16
        %v924 = vpop.permute.xlu0 %923
        %925 = vrot.lane.b32.xlu0 %v323, 16
        %v926 = vpop.permute.xlu0 %925
        %927 = vrot.lane.b32.xlu0 %v324, 16
        %v928 = vpop.permute.xlu0 %927
        %929 = vrot.lane.b32.xlu0 %v325, 16
        %v930 = vpop.permute.xlu0 %929
        %931 = vrot.lane.b32.xlu0 %v326, 16
        %v932 = vpop.permute.xlu0 %931
        %933 = vrot.lane.b32.xlu0 %v327, 16
        %v934 = vpop.permute.xlu0 %933
        %935 = vrot.lane.b32.xlu0 %v328, 16
        %v936 = vpop.permute.xlu0 %935
        %937 = vrot.lane.b32.xlu0 %v329, 16
        %v938 = vpop.permute.xlu0 %937
        %1003 = vrot.lane.b32.xlu0 %v330, 20
        %v1004 = vpop.permute.xlu0 %1003
        %1005 = vrot.lane.b32.xlu0 %v331, 20
        %v1006 = vpop.permute.xlu0 %1005
        %1007 = vrot.lane.b32.xlu0 %v332, 20
        %v1008 = vpop.permute.xlu0 %1007
        %1009 = vrot.lane.b32.xlu0 %v333, 20
        %v1010 = vpop.permute.xlu0 %1009
        %1011 = vrot.lane.b32.xlu0 %v334, 20
        %v1012 = vpop.permute.xlu0 %1011
        %1013 = vrot.lane.b32.xlu0 %v335, 20
        %v1014 = vpop.permute.xlu0 %1013
        %1015 = vrot.lane.b32.xlu0 %v336, 20
        %v1016 = vpop.permute.xlu0 %1015
        %1017 = vrot.lane.b32.xlu0 %v337, 20
        %v1018 = vpop.permute.xlu0 %1017
        %1019 = vrot.lane.b32.xlu0 %v338, 20
        %v1020 = vpop.permute.xlu0 %1019
        %1021 = vrot.lane.b32.xlu0 %v339, 20
        %v1022 = vpop.permute.xlu0 %1021
        %1023 = vrot.lane.b32.xlu0 %v340, 20
        %v1024 = vpop.permute.xlu0 %1023
        %1025 = vrot.lane.b32.xlu0 %v341, 20
        %v1026 = vpop.permute.xlu0 %1025
        %1027 = vrot.lane.b32.xlu0 %v342, 20
        %v1028 = vpop.permute.xlu0 %1027
        %1029 = vrot.lane.b32.xlu0 %v343, 20
        %v1030 = vpop.permute.xlu0 %1029
        %1031 = vrot.lane.b32.xlu0 %v344, 20
        %v1032 = vpop.permute.xlu0 %1031
        %1033 = vrot.lane.b32.xlu0 %v345, 20
        %v1034 = vpop.permute.xlu0 %1033
        %1035 = vrot.lane.b32.xlu0 %v346, 20
        %v1036 = vpop.permute.xlu0 %1035
        %1037 = vrot.lane.b32.xlu0 %v347, 20
        %v1038 = vpop.permute.xlu0 %1037
        %1039 = vrot.lane.b32.xlu0 %v348, 20
        %v1040 = vpop.permute.xlu0 %1039
        %1041 = vrot.lane.b32.xlu0 %v349, 20
        %v1042 = vpop.permute.xlu0 %1041
        %1043 = vrot.lane.b32.xlu0 %v350, 20
        %v1044 = vpop.permute.xlu0 %1043
        %1045 = vrot.lane.b32.xlu0 %v351, 20
        %v1046 = vpop.permute.xlu0 %1045
        %1047 = vrot.lane.b32.xlu0 %v352, 20
        %v1048 = vpop.permute.xlu0 %1047
        %1049 = vrot.lane.b32.xlu0 %v353, 20
        %v1050 = vpop.permute.xlu0 %1049
        %1051 = vrot.lane.b32.xlu0 %v354, 20
        %v1052 = vpop.permute.xlu0 %1051
        %1053 = vrot.lane.b32.xlu0 %v355, 20
        %v1054 = vpop.permute.xlu0 %1053
        %1055 = vrot.lane.b32.xlu0 %v356, 20
        %v1056 = vpop.permute.xlu0 %1055
        %1057 = vrot.lane.b32.xlu0 %v357, 20
        %v1058 = vpop.permute.xlu0 %1057
        %1059 = vrot.lane.b32.xlu0 %v358, 20
        %v1060 = vpop.permute.xlu0 %1059
        %1061 = vrot.lane.b32.xlu0 %v359, 20
        %v1062 = vpop.permute.xlu0 %1061
        %1063 = vrot.lane.b32.xlu0 %v360, 20
        %v1064 = vpop.permute.xlu0 %1063
        %1065 = vrot.lane.b32.xlu0 %v361, 20
        %v1066 = vpop.permute.xlu0 %1065
        %1131 = vrot.lane.b32.xlu0 %v363, 24
        %v1132 = vpop.permute.xlu0 %1131
        %1133 = vrot.lane.b32.xlu0 %v364, 24
        %v1134 = vpop.permute.xlu0 %1133
        %1135 = vrot.lane.b32.xlu0 %v365, 24
        %v1136 = vpop.permute.xlu0 %1135
        %1137 = vrot.lane.b32.xlu0 %v366, 24
        %v1138 = vpop.permute.xlu0 %1137
        %1139 = vrot.lane.b32.xlu0 %v367, 24
        %v1140 = vpop.permute.xlu0 %1139
        %1141 = vrot.lane.b32.xlu0 %v368, 24
        %v1142 = vpop.permute.xlu0 %1141
        %1143 = vrot.lane.b32.xlu0 %v369, 24
        %v1144 = vpop.permute.xlu0 %1143
        %1145 = vrot.lane.b32.xlu0 %v370, 24
        %v1146 = vpop.permute.xlu0 %1145
        %1147 = vrot.lane.b32.xlu0 %v371, 24
        %v1148 = vpop.permute.xlu0 %1147
        %1149 = vrot.lane.b32.xlu0 %v372, 24
        %v1150 = vpop.permute.xlu0 %1149
        %1151 = vrot.lane.b32.xlu0 %v373, 24
        %v1152 = vpop.permute.xlu0 %1151
        %1153 = vrot.lane.b32.xlu0 %v374, 24
        %v1154 = vpop.permute.xlu0 %1153
        %1155 = vrot.lane.b32.xlu0 %v375, 24
        %v1156 = vpop.permute.xlu0 %1155
        %1157 = vrot.lane.b32.xlu0 %v376, 24
        %v1158 = vpop.permute.xlu0 %1157
        %1159 = vrot.lane.b32.xlu0 %v377, 24
        %v1160 = vpop.permute.xlu0 %1159
        %1161 = vrot.lane.b32.xlu0 %v378, 24
        %v1162 = vpop.permute.xlu0 %1161
        %1163 = vrot.lane.b32.xlu0 %v379, 24
        %v1164 = vpop.permute.xlu0 %1163
        %1165 = vrot.lane.b32.xlu0 %v380, 24
        %v1166 = vpop.permute.xlu0 %1165
        %1167 = vrot.lane.b32.xlu0 %v381, 24
        %v1168 = vpop.permute.xlu0 %1167
        %1169 = vrot.lane.b32.xlu0 %v382, 24
        %v1170 = vpop.permute.xlu0 %1169
        %1171 = vrot.lane.b32.xlu0 %v383, 24
        %v1172 = vpop.permute.xlu0 %1171
        %1173 = vrot.lane.b32.xlu0 %v384, 24
        %v1174 = vpop.permute.xlu0 %1173
        %1175 = vrot.lane.b32.xlu0 %v385, 24
        %v1176 = vpop.permute.xlu0 %1175
        %1177 = vrot.lane.b32.xlu0 %v386, 24
        %v1178 = vpop.permute.xlu0 %1177
        %1179 = vrot.lane.b32.xlu0 %v387, 24
        %v1180 = vpop.permute.xlu0 %1179
        %1181 = vrot.lane.b32.xlu0 %v388, 24
        %v1182 = vpop.permute.xlu0 %1181
        %1183 = vrot.lane.b32.xlu0 %v389, 24
        %v1184 = vpop.permute.xlu0 %1183
        %1185 = vrot.lane.b32.xlu0 %v390, 24
        %v1186 = vpop.permute.xlu0 %1185
        %1187 = vrot.lane.b32.xlu0 %v391, 24
        %v1188 = vpop.permute.xlu0 %1187
        %1189 = vrot.lane.b32.xlu0 %v392, 24
        %v1190 = vpop.permute.xlu0 %1189
        %1191 = vrot.lane.b32.xlu0 %v393, 24
        %v1192 = vpop.permute.xlu0 %1191
        %1193 = vrot.lane.b32.xlu0 %v394, 24
        %v1194 = vpop.permute.xlu0 %1193
        %1259 = vrot.lane.b32.xlu0 %v395, 28
        %v1260 = vpop.permute.xlu0 %1259
        %1261 = vrot.lane.b32.xlu0 %v396, 28
        %v1262 = vpop.permute.xlu0 %1261
        %1263 = vrot.lane.b32.xlu0 %v397, 28
        %v1264 = vpop.permute.xlu0 %1263
        %1265 = vrot.lane.b32.xlu0 %v398, 28
        %v1266 = vpop.permute.xlu0 %1265
        %1267 = vrot.lane.b32.xlu0 %v399, 28
        %v1268 = vpop.permute.xlu0 %1267
        %1269 = vrot.lane.b32.xlu0 %v400, 28
        %v1270 = vpop.permute.xlu0 %1269
        %1271 = vrot.lane.b32.xlu0 %v401, 28
        %v1272 = vpop.permute.xlu0 %1271
        %1273 = vrot.lane.b32.xlu0 %v402, 28
        %v1274 = vpop.permute.xlu0 %1273
        %1275 = vrot.lane.b32.xlu0 %v403, 28
        %v1276 = vpop.permute.xlu0 %1275
        %1277 = vrot.lane.b32.xlu0 %v404, 28
        %v1278 = vpop.permute.xlu0 %1277
        %1279 = vrot.lane.b32.xlu0 %v405, 28
        %v1280 = vpop.permute.xlu0 %1279
        %1281 = vrot.lane.b32.xlu0 %v406, 28
        %v1282 = vpop.permute.xlu0 %1281
        %1283 = vrot.lane.b32.xlu0 %v407, 28
        %v1284 = vpop.permute.xlu0 %1283
        %1285 = vrot.lane.b32.xlu0 %v408, 28
        %v1286 = vpop.permute.xlu0 %1285
        %1287 = vrot.lane.b32.xlu0 %v409, 28
        %v1288 = vpop.permute.xlu0 %1287
        %1289 = vrot.lane.b32.xlu0 %v410, 28
        %v1290 = vpop.permute.xlu0 %1289
        %1291 = vrot.lane.b32.xlu0 %v411, 28
        %v1292 = vpop.permute.xlu0 %1291
        %1293 = vrot.lane.b32.xlu0 %v412, 28
        %v1294 = vpop.permute.xlu0 %1293
        %1295 = vrot.lane.b32.xlu0 %v413, 28
        %v1296 = vpop.permute.xlu0 %1295
        %1297 = vrot.lane.b32.xlu0 %v414, 28
        %v1298 = vpop.permute.xlu0 %1297
        %1299 = vrot.lane.b32.xlu0 %v415, 28
        %v1300 = vpop.permute.xlu0 %1299
        %1301 = vrot.lane.b32.xlu0 %v416, 28
        %v1302 = vpop.permute.xlu0 %1301
        %1303 = vrot.lane.b32.xlu0 %v417, 28
        %v1304 = vpop.permute.xlu0 %1303
        %1305 = vrot.lane.b32.xlu0 %v418, 28
        %v1306 = vpop.permute.xlu0 %1305
        %1307 = vrot.lane.b32.xlu0 %v419, 28
        %v1308 = vpop.permute.xlu0 %1307
        %1309 = vrot.lane.b32.xlu0 %v420, 28
        %v1310 = vpop.permute.xlu0 %1309
        %1311 = vrot.lane.b32.xlu0 %v421, 28
        %v1312 = vpop.permute.xlu0 %1311
        %1313 = vrot.lane.b32.xlu0 %v422, 28
        %v1314 = vpop.permute.xlu0 %1313
        %1315 = vrot.lane.b32.xlu0 %v423, 28
        %v1316 = vpop.permute.xlu0 %1315
        %1317 = vrot.lane.b32.xlu0 %v424, 28
        %v1318 = vpop.permute.xlu0 %1317
        %1319 = vrot.lane.b32.xlu0 %v425, 28
        %v1320 = vpop.permute.xlu0 %1319
        %1321 = vrot.lane.b32.xlu0 %v426, 28
        %v1322 = vpop.permute.xlu0 %1321
        %1387 = vrot.lane.b32.xlu0 %v427, 32
        %v1388 = vpop.permute.xlu0 %1387
        %1389 = vrot.lane.b32.xlu0 %v428, 32
        %v1390 = vpop.permute.xlu0 %1389
        %1391 = vrot.lane.b32.xlu0 %v429, 32
        %v1392 = vpop.permute.xlu0 %1391
        %1393 = vrot.lane.b32.xlu0 %v430, 32
        %v1394 = vpop.permute.xlu0 %1393
        %1395 = vrot.lane.b32.xlu0 %v431, 32
        %v1396 = vpop.permute.xlu0 %1395
        %1397 = vrot.lane.b32.xlu0 %v432, 32
        %v1398 = vpop.permute.xlu0 %1397
        %1399 = vrot.lane.b32.xlu0 %v433, 32
        %v1400 = vpop.permute.xlu0 %1399
        %1401 = vrot.lane.b32.xlu0 %v434, 32
        %v1402 = vpop.permute.xlu0 %1401
        %1403 = vrot.lane.b32.xlu0 %v435, 32
        %v1404 = vpop.permute.xlu0 %1403
        %1405 = vrot.lane.b32.xlu0 %v436, 32
        %v1406 = vpop.permute.xlu0 %1405
        %1407 = vrot.lane.b32.xlu0 %v437, 32
        %v1408 = vpop.permute.xlu0 %1407
        %1409 = vrot.lane.b32.xlu0 %v438, 32
        %v1410 = vpop.permute.xlu0 %1409
        %1411 = vrot.lane.b32.xlu0 %v439, 32
        %v1412 = vpop.permute.xlu0 %1411
        %1413 = vrot.lane.b32.xlu0 %v440, 32
        %v1414 = vpop.permute.xlu0 %1413
        %1415 = vrot.lane.b32.xlu0 %v441, 32
        %v1416 = vpop.permute.xlu0 %1415
        %1417 = vrot.lane.b32.xlu0 %v442, 32
        %v1418 = vpop.permute.xlu0 %1417
        %1419 = vrot.lane.b32.xlu0 %v443, 32
        %v1420 = vpop.permute.xlu0 %1419
        %1421 = vrot.lane.b32.xlu0 %v444, 32
        %v1422 = vpop.permute.xlu0 %1421
        %1423 = vrot.lane.b32.xlu0 %v445, 32
        %v1424 = vpop.permute.xlu0 %1423
        %1425 = vrot.lane.b32.xlu0 %v446, 32
        %v1426 = vpop.permute.xlu0 %1425
        %1427 = vrot.lane.b32.xlu0 %v447, 32
        %v1428 = vpop.permute.xlu0 %1427
        %1429 = vrot.lane.b32.xlu0 %v448, 32
        %v1430 = vpop.permute.xlu0 %1429
        %1431 = vrot.lane.b32.xlu0 %v449, 32
        %v1432 = vpop.permute.xlu0 %1431
        %1433 = vrot.lane.b32.xlu0 %v450, 32
        %v1434 = vpop.permute.xlu0 %1433
        %1435 = vrot.lane.b32.xlu0 %v451, 32
        %v1436 = vpop.permute.xlu0 %1435
        %1437 = vrot.lane.b32.xlu0 %v452, 32
        %v1438 = vpop.permute.xlu0 %1437
        %1439 = vrot.lane.b32.xlu0 %v453, 32
        %v1440 = vpop.permute.xlu0 %1439
        %1441 = vrot.lane.b32.xlu0 %v454, 32
        %v1442 = vpop.permute.xlu0 %1441
        %1443 = vrot.lane.b32.xlu0 %v455, 32
        %v1444 = vpop.permute.xlu0 %1443
        %1445 = vrot.lane.b32.xlu0 %v456, 32
        %v1446 = vpop.permute.xlu0 %1445
        %1447 = vrot.lane.b32.xlu0 %v457, 32
        %v1448 = vpop.permute.xlu0 %1447
        %1449 = vrot.lane.b32.xlu0 %v458, 32
        %v1450 = vpop.permute.xlu0 %1449
        %vm1483 = vcmask 31744
        %v1484 = vsel %vm1483, %v169, %v492
        %v1485 = vsel %vm1483, %v170, %v494
        %v1486 = vsel %vm1483, %v171, %v496
        %v1487 = vsel %vm1483, %v172, %v498
        %v1488 = vsel %vm1483, %v173, %v500
        %v1489 = vsel %vm1483, %v174, %v502
        %v1490 = vsel %vm1483, %v175, %v504
        %v1491 = vsel %vm1483, %v176, %v506
        %v1492 = vsel %vm1483, %v177, %v508
        %v1493 = vsel %vm1483, %v178, %v510
        %v1494 = vsel %vm1483, %v179, %v512
        %v1495 = vsel %vm1483, %v180, %v514
        %v1496 = vsel %vm1483, %v181, %v516
        %v1497 = vsel %vm1483, %v182, %v518
        %v1498 = vsel %vm1483, %v183, %v520
        %v1499 = vsel %vm1483, %v184, %v522
        %v1500 = vsel %vm1483, %v185, %v524
        %v1501 = vsel %vm1483, %v186, %v526
        %v1502 = vsel %vm1483, %v187, %v528
        %v1503 = vsel %vm1483, %v188, %v530
        %v1504 = vsel %vm1483, %v189, %v532
        %v1505 = vsel %vm1483, %v190, %v534
        %v1506 = vsel %vm1483, %v191, %v536
        %v1507 = vsel %vm1483, %v192, %v538
        %v1508 = vsel %vm1483, %v193, %v540
        %v1509 = vsel %vm1483, %v194, %v542
        %v1510 = vsel %vm1483, %v195, %v544
        %v1511 = vsel %vm1483, %v196, %v546
        %v1512 = vsel %vm1483, %v197, %v548
        %v1513 = vsel %vm1483, %v198, %v550
        %v1514 = vsel %vm1483, %v199, %v552
        %v1515 = vsel %vm1483, %v200, %v554
        %vm1516 = vcmask 64512
        %v1517 = vsel %vm1516, %v1484, %v620
        %v1518 = vsel %vm1516, %v1485, %v622
        %v1519 = vsel %vm1516, %v1486, %v624
        %v1520 = vsel %vm1516, %v1487, %v626
        %v1521 = vsel %vm1516, %v1488, %v628
        %v1522 = vsel %vm1516, %v1489, %v630
        %v1523 = vsel %vm1516, %v1490, %v632
        %v1524 = vsel %vm1516, %v1491, %v634
        %v1525 = vsel %vm1516, %v1492, %v636
        %v1526 = vsel %vm1516, %v1493, %v638
        %v1527 = vsel %vm1516, %v1494, %v640
        %v1528 = vsel %vm1516, %v1495, %v642
        %v1529 = vsel %vm1516, %v1496, %v644
        %v1530 = vsel %vm1516, %v1497, %v646
        %v1531 = vsel %vm1516, %v1498, %v648
        %v1532 = vsel %vm1516, %v1499, %v650
        %v1533 = vsel %vm1516, %v1500, %v652
        %v1534 = vsel %vm1516, %v1501, %v654
        %v1535 = vsel %vm1516, %v1502, %v656
        %v1536 = vsel %vm1516, %v1503, %v658
        %v1537 = vsel %vm1516, %v1504, %v660
        %v1538 = vsel %vm1516, %v1505, %v662
        %v1539 = vsel %vm1516, %v1506, %v664
        %v1540 = vsel %vm1516, %v1507, %v666
        %v1541 = vsel %vm1516, %v1508, %v668
        %v1542 = vsel %vm1516, %v1509, %v670
        %v1543 = vsel %vm1516, %v1510, %v672
        %v1544 = vsel %vm1516, %v1511, %v674
        %v1545 = vsel %vm1516, %v1512, %v676
        %v1546 = vsel %vm1516, %v1513, %v678
        %v1547 = vsel %vm1516, %v1514, %v680
        %v1548 = vsel %vm1516, %v1515, %v682
        %vm1549 = vcmask 97280
        %v1550 = vsel %vm1549, %v1517, %v748
        %v1551 = vsel %vm1549, %v1518, %v750
        %v1552 = vsel %vm1549, %v1519, %v752
        %v1553 = vsel %vm1549, %v1520, %v754
        %v1554 = vsel %vm1549, %v1521, %v756
        %v1555 = vsel %vm1549, %v1522, %v758
        %v1556 = vsel %vm1549, %v1523, %v760
        %v1557 = vsel %vm1549, %v1524, %v762
        %v1558 = vsel %vm1549, %v1525, %v764
        %v1559 = vsel %vm1549, %v1526, %v766
        %v1560 = vsel %vm1549, %v1527, %v768
        %v1561 = vsel %vm1549, %v1528, %v770
        %v1562 = vsel %vm1549, %v1529, %v772
        %v1563 = vsel %vm1549, %v1530, %v774
        %v1564 = vsel %vm1549, %v1531, %v776
        %v1565 = vsel %vm1549, %v1532, %v778
        %v1566 = vsel %vm1549, %v1533, %v780
        %v1567 = vsel %vm1549, %v1534, %v782
        %v1568 = vsel %vm1549, %v1535, %v784
        %v1569 = vsel %vm1549, %v1536, %v786
        %v1570 = vsel %vm1549, %v1537, %v788
        %v1571 = vsel %vm1549, %v1538, %v790
        %v1572 = vsel %vm1549, %v1539, %v792
        %v1573 = vsel %vm1549, %v1540, %v794
        %v1574 = vsel %vm1549, %v1541, %v796
        %v1575 = vsel %vm1549, %v1542, %v798
        %v1576 = vsel %vm1549, %v1543, %v800
        %v1577 = vsel %vm1549, %v1544, %v802
        %v1578 = vsel %vm1549, %v1545, %v804
        %v1579 = vsel %vm1549, %v1546, %v806
        %v1580 = vsel %vm1549, %v1547, %v808
        %v1581 = vsel %vm1549, %v1548, %v810
        %vm1582 = vcmask 130048
        %v1583 = vsel %vm1582, %v1550, %v876
        %v1584 = vsel %vm1582, %v1551, %v878
        %v1585 = vsel %vm1582, %v1552, %v880
        %v1586 = vsel %vm1582, %v1553, %v882
        %v1587 = vsel %vm1582, %v1554, %v884
        %v1588 = vsel %vm1582, %v1555, %v886
        %v1589 = vsel %vm1582, %v1556, %v888
        %v1590 = vsel %vm1582, %v1557, %v890
        %v1591 = vsel %vm1582, %v1558, %v892
        %v1592 = vsel %vm1582, %v1559, %v894
        %v1593 = vsel %vm1582, %v1560, %v896
        %v1594 = vsel %vm1582, %v1561, %v898
        %v1595 = vsel %vm1582, %v1562, %v900
        %v1596 = vsel %vm1582, %v1563, %v902
        %v1597 = vsel %vm1582, %v1564, %v904
        %v1598 = vsel %vm1582, %v1565, %v906
        %v1599 = vsel %vm1582, %v1566, %v908
        %v1600 = vsel %vm1582, %v1567, %v910
        %v1601 = vsel %vm1582, %v1568, %v912
        %v1602 = vsel %vm1582, %v1569, %v914
        %v1603 = vsel %vm1582, %v1570, %v916
        %v1604 = vsel %vm1582, %v1571, %v918
        %v1605 = vsel %vm1582, %v1572, %v920
        %v1606 = vsel %vm1582, %v1573, %v922
        %v1607 = vsel %vm1582, %v1574, %v924
        %v1608 = vsel %vm1582, %v1575, %v926
        %v1609 = vsel %vm1582, %v1576, %v928
        %v1610 = vsel %vm1582, %v1577, %v930
        %v1611 = vsel %vm1582, %v1578, %v932
        %v1612 = vsel %vm1582, %v1579, %v934
        %v1613 = vsel %vm1582, %v1580, %v936
        %v1614 = vsel %vm1582, %v1581, %v938
        %vm1615 = vcmask 162816
        %v1616 = vsel %vm1615, %v1583, %v1004
        %v1617 = vsel %vm1615, %v1584, %v1006
        %v1618 = vsel %vm1615, %v1585, %v1008
        %v1619 = vsel %vm1615, %v1586, %v1010
        %v1620 = vsel %vm1615, %v1587, %v1012
        %v1621 = vsel %vm1615, %v1588, %v1014
        %v1622 = vsel %vm1615, %v1589, %v1016
        %v1623 = vsel %vm1615, %v1590, %v1018
        %v1624 = vsel %vm1615, %v1591, %v1020
        %v1625 = vsel %vm1615, %v1592, %v1022
        %v1626 = vsel %vm1615, %v1593, %v1024
        %v1627 = vsel %vm1615, %v1594, %v1026
        %v1628 = vsel %vm1615, %v1595, %v1028
        %v1629 = vsel %vm1615, %v1596, %v1030
        %v1630 = vsel %vm1615, %v1597, %v1032
        %v1631 = vsel %vm1615, %v1598, %v1034
        %v1632 = vsel %vm1615, %v1599, %v1036
        %v1633 = vsel %vm1615, %v1600, %v1038
        %v1634 = vsel %vm1615, %v1601, %v1040
        %v1635 = vsel %vm1615, %v1602, %v1042
        %v1636 = vsel %vm1615, %v1603, %v1044
        %v1637 = vsel %vm1615, %v1604, %v1046
        %v1638 = vsel %vm1615, %v1605, %v1048
        %v1639 = vsel %vm1615, %v1606, %v1050
        %v1640 = vsel %vm1615, %v1607, %v1052
        %v1641 = vsel %vm1615, %v1608, %v1054
        %v1642 = vsel %vm1615, %v1609, %v1056
        %v1643 = vsel %vm1615, %v1610, %v1058
        %v1644 = vsel %vm1615, %v1611, %v1060
        %v1645 = vsel %vm1615, %v1612, %v1062
        %v1646 = vsel %vm1615, %v1613, %v1064
        %v1647 = vsel %vm1615, %v1614, %v1066
        %vm1648 = vcmask 195584
        %v1649 = vsel %vm1648, %v1616, %v1132
        %v1650 = vsel %vm1648, %v1617, %v1134
        %v1651 = vsel %vm1648, %v1618, %v1136
        %v1652 = vsel %vm1648, %v1619, %v1138
        %v1653 = vsel %vm1648, %v1620, %v1140
        %v1654 = vsel %vm1648, %v1621, %v1142
        %v1655 = vsel %vm1648, %v1622, %v1144
        %v1656 = vsel %vm1648, %v1623, %v1146
        %v1657 = vsel %vm1648, %v1624, %v1148
        %v1658 = vsel %vm1648, %v1625, %v1150
        %v1659 = vsel %vm1648, %v1626, %v1152
        %v1660 = vsel %vm1648, %v1627, %v1154
        %v1661 = vsel %vm1648, %v1628, %v1156
        %v1662 = vsel %vm1648, %v1629, %v1158
        %v1663 = vsel %vm1648, %v1630, %v1160
        %v1664 = vsel %vm1648, %v1631, %v1162
        %v1665 = vsel %vm1648, %v1632, %v1164
        %v1666 = vsel %vm1648, %v1633, %v1166
        %v1667 = vsel %vm1648, %v1634, %v1168
        %v1668 = vsel %vm1648, %v1635, %v1170
        %v1669 = vsel %vm1648, %v1636, %v1172
        %v1670 = vsel %vm1648, %v1637, %v1174
        %v1671 = vsel %vm1648, %v1638, %v1176
        %v1672 = vsel %vm1648, %v1639, %v1178
        %v1673 = vsel %vm1648, %v1640, %v1180
        %v1674 = vsel %vm1648, %v1641, %v1182
        %v1675 = vsel %vm1648, %v1642, %v1184
        %v1676 = vsel %vm1648, %v1643, %v1186
        %v1677 = vsel %vm1648, %v1644, %v1188
        %v1678 = vsel %vm1648, %v1645, %v1190
        %v1679 = vsel %vm1648, %v1646, %v1192
        %v1680 = vsel %vm1648, %v1647, %v1194
        %vm1681 = vcmask 228352
        %v1682 = vsel %vm1681, %v1649, %v1260
        %v1683 = vsel %vm1681, %v1650, %v1262
        %v1684 = vsel %vm1681, %v1651, %v1264
        %v1685 = vsel %vm1681, %v1652, %v1266
        %v1686 = vsel %vm1681, %v1653, %v1268
        %v1687 = vsel %vm1681, %v1654, %v1270
        %v1688 = vsel %vm1681, %v1655, %v1272
        %v1689 = vsel %vm1681, %v1656, %v1274
        %v1690 = vsel %vm1681, %v1657, %v1276
        %v1691 = vsel %vm1681, %v1658, %v1278
        %v1692 = vsel %vm1681, %v1659, %v1280
        %v1693 = vsel %vm1681, %v1660, %v1282
        %v1694 = vsel %vm1681, %v1661, %v1284
        %v1695 = vsel %vm1681, %v1662, %v1286
        %v1696 = vsel %vm1681, %v1663, %v1288
        %v1697 = vsel %vm1681, %v1664, %v1290
        %v1698 = vsel %vm1681, %v1665, %v1292
        %v1699 = vsel %vm1681, %v1666, %v1294
        %v1700 = vsel %vm1681, %v1667, %v1296
        %v1701 = vsel %vm1681, %v1668, %v1298
        %v1702 = vsel %vm1681, %v1669, %v1300
        %v1703 = vsel %vm1681, %v1670, %v1302
        %v1704 = vsel %vm1681, %v1671, %v1304
        %v1705 = vsel %vm1681, %v1672, %v1306
        %v1706 = vsel %vm1681, %v1673, %v1308
        %v1707 = vsel %vm1681, %v1674, %v1310
        %v1708 = vsel %vm1681, %v1675, %v1312
        %v1709 = vsel %vm1681, %v1676, %v1314
        %v1710 = vsel %vm1681, %v1677, %v1316
        %v1711 = vsel %vm1681, %v1678, %v1318
        %v1712 = vsel %vm1681, %v1679, %v1320
        %v1713 = vsel %vm1681, %v1680, %v1322
        %vm1714 = vcmask 261120
        %v1715 = vsel %vm1714, %v1682, %v1388
        %v1716 = vsel %vm1714, %v1683, %v1390
        %v1717 = vsel %vm1714, %v1684, %v1392
        %v1718 = vsel %vm1714, %v1685, %v1394
        %v1719 = vsel %vm1714, %v1686, %v1396
        %v1720 = vsel %vm1714, %v1687, %v1398
        %v1721 = vsel %vm1714, %v1688, %v1400
        %v1722 = vsel %vm1714, %v1689, %v1402
        %v1723 = vsel %vm1714, %v1690, %v1404
        %v1724 = vsel %vm1714, %v1691, %v1406
        %v1725 = vsel %vm1714, %v1692, %v1408
        %v1726 = vsel %vm1714, %v1693, %v1410
        %v1727 = vsel %vm1714, %v1694, %v1412
        %v1728 = vsel %vm1714, %v1695, %v1414
        %v1729 = vsel %vm1714, %v1696, %v1416
        %v1730 = vsel %vm1714, %v1697, %v1418
        %v1731 = vsel %vm1714, %v1698, %v1420
        %v1732 = vsel %vm1714, %v1699, %v1422
        %v1733 = vsel %vm1714, %v1700, %v1424
        %v1734 = vsel %vm1714, %v1701, %v1426
        %v1735 = vsel %vm1714, %v1702, %v1428
        %v1736 = vsel %vm1714, %v1703, %v1430
        %v1737 = vsel %vm1714, %v1704, %v1432
        %v1738 = vsel %vm1714, %v1705, %v1434
        %v1739 = vsel %vm1714, %v1706, %v1436
        %v1740 = vsel %vm1714, %v1707, %v1438
        %v1741 = vsel %vm1714, %v1708, %v1440
        %v1742 = vsel %vm1714, %v1709, %v1442
        %v1743 = vsel %vm1714, %v1710, %v1444
        %v1744 = vsel %vm1714, %v1711, %v1446
        %v1745 = vsel %vm1714, %v1712, %v1448
        %v1746 = vsel %vm1714, %v1713, %v1450
        %v1747 = vld [vmem:[%s1] sm:$0xff]
        %v1748 = vld [vmem:[%s1 + $0x8] sm:$0xff]
        %v1749 = vld [vmem:[%s1 + $0x10] sm:$0xff]
        %v1750 = vld [vmem:[%s1 + $0x18] sm:$0xff]
        %v1751 = vld [vmem:[%s1 + $0x20] sm:$0xf]
        %v1752 = vld [vmem:[%s2] sm:$0x1]
        %v1754 = vlaneseq
        %v1755 = vshrl.u32 %v1754, 7
        %v1756 = vsub.s32 0, %v1755
        %v1757 = vrot.slane %v1752, %v1756
        %vm1759 = vcmask 293888
        %v1761 = vsel %vm1759, %v1715, 0
        %v1764 = vsel %vm1759, %v1716, 0
        %v1767 = vsel %vm1759, %v1717, 0
        %v1770 = vsel %vm1759, %v1718, 0
        %v1773 = vsel %vm1759, %v1719, 0
        %v1776 = vsel %vm1759, %v1720, 0
        %v1779 = vsel %vm1759, %v1721, 0
        %v1782 = vsel %vm1759, %v1722, 0
        %v1785 = vsel %vm1759, %v1723, 0
        %v1788 = vsel %vm1759, %v1724, 0
        %v1791 = vsel %vm1759, %v1725, 0
        %v1794 = vsel %vm1759, %v1726, 0
        %v1797 = vsel %vm1759, %v1727, 0
        %v1800 = vsel %vm1759, %v1728, 0
        %v1803 = vsel %vm1759, %v1729, 0
        %v1806 = vsel %vm1759, %v1730, 0
        %v1809 = vsel %vm1759, %v1731, 0
        %v1812 = vsel %vm1759, %v1732, 0
        %v1815 = vsel %vm1759, %v1733, 0
        %v1818 = vsel %vm1759, %v1734, 0
        %v1821 = vsel %vm1759, %v1735, 0
        %v1824 = vsel %vm1759, %v1736, 0
        %v1827 = vsel %vm1759, %v1737, 0
        %v1830 = vsel %vm1759, %v1738, 0
        %v1833 = vsel %vm1759, %v1739, 0
        %v1836 = vsel %vm1759, %v1740, 0
        %v1839 = vsel %vm1759, %v1741, 0
        %v1842 = vsel %vm1759, %v1742, 0
        %v1845 = vsel %vm1759, %v1743, 0
        %v1848 = vsel %vm1759, %v1744, 0
        %v1851 = vsel %vm1759, %v1745, 0
        %v1854 = vsel %vm1759, %v1746, 0
        %vm1856 = vcmask 1043456
        %v1858 = vsel %vm1856, %v1751, 0
        %1860 = vmatprep.subr.mxu0 0.0
        %1861 = vmatpush1.msra.mxu0 %v1747
        %1862 = vmatprep.subr.mxu0 0.0
        %1863 = vmatpush1.msra.mxu0 %v1748
        %1864 = vmatprep.subr.mxu0 0.0
        %1865 = vmatpush1.msra.mxu0 %v1749
        %1866 = vmatprep.subr.mxu0 0.0
        %1867 = vmatpush1.msra.mxu0 %v1750
        %1868 = vmatprep.subr.mxu0 0.0
        %1869 = vmatpush1.msra.mxu0 %v1858
        %1870 = vmatprep.subr.mxu0 0.0
        %1871 = vmatpush1.msra.mxu0 0.0
        %1872 = vmatprep.subr.mxu0 0.0
        %1873 = vmatpush1.msra.mxu0 0.0
        %1874 = vmatprep.subr.mxu0 0.0
        %1875 = vmatpush1.msra.mxu0 0.0
        %1876 = vmatprep.subr.mxu0 0.0
        %1877 = vmatpush1.msra.mxu0 0.0
        %1878 = vmatprep.subr.mxu0 0.0
        %1879 = vmatpush1.msra.mxu0 0.0
        %1880 = vmatprep.subr.mxu0 0.0
        %1881 = vmatpush1.msra.mxu0 0.0
        %1882 = vmatprep.subr.mxu0 0.0
        %1883 = vmatpush1.msra.mxu0 0.0
        %1884 = vmatprep.subr.mxu0 0.0
        %1885 = vmatpush1.msra.mxu0 0.0
        %1886 = vmatprep.subr.mxu0 0.0
        %1887 = vmatpush1.msra.mxu0 0.0
        %1888 = vmatprep.subr.mxu0 0.0
        %1889 = vmatpush1.msra.mxu0 0.0
        %1890 = vmatprep.subr.mxu0 0.0
        %1891 = vmatpush1.msra.mxu0 0.0
        %1892 = vmatprep.subr.mxu0 0.0
        %1893 = vmatpush1.msra.mxu0 0.0
        %1894 = vmatprep.subr.mxu0 0.0
        %1895 = vmatpush1.msra.mxu0 0.0
        %1896 = vmatprep.subr.mxu0 0.0
        %1897 = vmatpush1.msra.mxu0 0.0
        %1898 = vmatprep.subr.mxu0 0.0
        %1899 = vmatpush1.msra.mxu0 0.0
        %1900 = vmatprep.subr.mxu0 0.0
        %1901 = vmatpush1.msra.mxu0 0.0
        %1902 = vmatprep.subr.mxu0 0.0
        %1903 = vmatpush1.msra.mxu0 0.0
        %1904 = vmatprep.subr.mxu0 0.0
        %1905 = vmatpush1.msra.mxu0 0.0
        %1906 = vmatprep.subr.mxu0 0.0
        %1907 = vmatpush1.msra.mxu0 0.0
        %1908 = vmatprep.subr.mxu0 0.0
        %1909 = vmatpush1.msra.mxu0 0.0
        %1910 = vmatprep.subr.mxu0 0.0
        %1911 = vmatpush1.msra.mxu0 0.0
        %1912 = vmatprep.subr.mxu0 0.0
        %1913 = vmatpush1.msra.mxu0 0.0
        %1914 = vmatprep.subr.mxu0 0.0
        %1915 = vmatpush1.msra.mxu0 0.0
        %1916 = vmatprep.subr.mxu0 0.0
        %1917 = vmatpush1.msra.mxu0 0.0
        %1918 = vmatprep.subr.mxu0 0.0
        %1919 = vmatpush1.msra.mxu0 0.0
        %1920 = vmatprep.subr.mxu0 0.0
        %1921 = vmatpush1.msra.mxu0 0.0
        %1922 = vmatprep.subr.mxu0 0.0
        %1923 = vmatpush1.msra.mxu0 0.0
        %1924 = vmatprep.mubr.f32.mxu0 0.0
        %1925 = vmatmul.mubr.f32.gmra.mrb[0].mxu0 %v1761
        %v1926 = vpop.f32.mrb[0].mxu0
        %v1927 = vadd.f32 %v1757, %v1926
        %v1928 = vpop.f32.mrb[0].mxu0
        %1929 = vmatprep.mubr.f32.mxu0 0.0
        %1930 = vmatmul.mubr.f32.gmra.mrb[0].mxu0 %v1764
        %v1931 = vpop.f32.mrb[0].mxu0
        %v1932 = vadd.f32 %v1757, %v1931
        %v1933 = vpop.f32.mrb[0].mxu0
        %1934 = vmatprep.mubr.f32.mxu0 0.0
        %1935 = vmatmul.mubr.f32.gmra.mrb[0].mxu0 %v1767
        %v1936 = vpop.f32.mrb[0].mxu0
        %v1937 = vadd.f32 %v1757, %v1936
        %v1938 = vpop.f32.mrb[0].mxu0
        %1939 = vmatprep.mubr.f32.mxu0 0.0
        %1940 = vmatmul.mubr.f32.gmra.mrb[0].mxu0 %v1770
        %v1941 = vpop.f32.mrb[0].mxu0
        %v1942 = vadd.f32 %v1757, %v1941
        %v1943 = vpop.f32.mrb[0].mxu0
        %1944 = vmatprep.mubr.f32.mxu0 0.0
        %1945 = vmatmul.mubr.f32.gmra.mrb[0].mxu0 %v1773
        %v1946 = vpop.f32.mrb[0].mxu0
        %v1947 = vadd.f32 %v1757, %v1946
        %v1948 = vpop.f32.mrb[0].mxu0
        %1949 = vmatprep.mubr.f32.mxu0 0.0
        %1950 = vmatmul.mubr.f32.gmra.mrb[0].mxu0 %v1776
        %v1951 = vpop.f32.mrb[0].mxu0
        %v1952 = vadd.f32 %v1757, %v1951
        %v1953 = vpop.f32.mrb[0].mxu0
        %1954 = vmatprep.mubr.f32.mxu0 0.0
        %1955 = vmatmul.mubr.f32.gmra.mrb[0].mxu0 %v1779
        %v1956 = vpop.f32.mrb[0].mxu0
        %v1957 = vadd.f32 %v1757, %v1956
        %v1958 = vpop.f32.mrb[0].mxu0
        %1959 = vmatprep.mubr.f32.mxu0 0.0
        %1960 = vmatmul.mubr.f32.gmra.mrb[0].mxu0 %v1782
        %v1961 = vpop.f32.mrb[0].mxu0
        %v1962 = vadd.f32 %v1757, %v1961
        %v1963 = vpop.f32.mrb[0].mxu0
        %1964 = vmatprep.mubr.f32.mxu0 0.0
        %1965 = vmatmul.mubr.f32.gmra.mrb[0].mxu0 %v1785
        %v1966 = vpop.f32.mrb[0].mxu0
        %v1967 = vadd.f32 %v1757, %v1966
        %v1968 = vpop.f32.mrb[0].mxu0
        %1969 = vmatprep.mubr.f32.mxu0 0.0
        %1970 = vmatmul.mubr.f32.gmra.mrb[0].mxu0 %v1788
        %v1971 = vpop.f32.mrb[0].mxu0
        %v1972 = vadd.f32 %v1757, %v1971
        %v1973 = vpop.f32.mrb[0].mxu0
        %1974 = vmatprep.mubr.f32.mxu0 0.0
        %1975 = vmatmul.mubr.f32.gmra.mrb[0].mxu0 %v1791
        %v1976 = vpop.f32.mrb[0].mxu0
        %v1977 = vadd.f32 %v1757, %v1976
        %v1978 = vpop.f32.mrb[0].mxu0
        %1979 = vmatprep.mubr.f32.mxu0 0.0
        %1980 = vmatmul.mubr.f32.gmra.mrb[0].mxu0 %v1794
        %v1981 = vpop.f32.mrb[0].mxu0
        %v1982 = vadd.f32 %v1757, %v1981
        %v1983 = vpop.f32.mrb[0].mxu0
        %1984 = vmatprep.mubr.f32.mxu0 0.0
        %1985 = vmatmul.mubr.f32.gmra.mrb[0].mxu0 %v1797
        %v1986 = vpop.f32.mrb[0].mxu0
        %v1987 = vadd.f32 %v1757, %v1986
        %v1988 = vpop.f32.mrb[0].mxu0
        %1989 = vmatprep.mubr.f32.mxu0 0.0
        %1990 = vmatmul.mubr.f32.gmra.mrb[0].mxu0 %v1800
        %v1991 = vpop.f32.mrb[0].mxu0
        %v1992 = vadd.f32 %v1757, %v1991
        %v1993 = vpop.f32.mrb[0].mxu0
        %1994 = vmatprep.mubr.f32.mxu0 0.0
        %1995 = vmatmul.mubr.f32.gmra.mrb[0].mxu0 %v1803
        %v1996 = vpop.f32.mrb[0].mxu0
        %v1997 = vadd.f32 %v1757, %v1996
        %v1998 = vpop.f32.mrb[0].mxu0
        %1999 = vmatprep.mubr.f32.mxu0 0.0
        %2000 = vmatmul.mubr.f32.gmra.mrb[0].mxu0 %v1806
        %v2001 = vpop.f32.mrb[0].mxu0
        %v2002 = vadd.f32 %v1757, %v2001
        %v2003 = vpop.f32.mrb[0].mxu0
        %2004 = vmatprep.mubr.f32.mxu0 0.0
        %2005 = vmatmul.mubr.f32.gmra.mrb[0].mxu0 %v1809
        %v2006 = vpop.f32.mrb[0].mxu0
        %v2007 = vadd.f32 %v1757, %v2006
        %v2008 = vpop.f32.mrb[0].mxu0
        %2009 = vmatprep.mubr.f32.mxu0 0.0
        %2010 = vmatmul.mubr.f32.gmra.mrb[0].mxu0 %v1812
        %v2011 = vpop.f32.mrb[0].mxu0
        %v2012 = vadd.f32 %v1757, %v2011
        %v2013 = vpop.f32.mrb[0].mxu0
        %2014 = vmatprep.mubr.f32.mxu0 0.0
        %2015 = vmatmul.mubr.f32.gmra.mrb[0].mxu0 %v1815
        %v2016 = vpop.f32.mrb[0].mxu0
        %v2017 = vadd.f32 %v1757, %v2016
        %v2018 = vpop.f32.mrb[0].mxu0
        %2019 = vmatprep.mubr.f32.mxu0 0.0
        %2020 = vmatmul.mubr.f32.gmra.mrb[0].mxu0 %v1818
        %v2021 = vpop.f32.mrb[0].mxu0
        %v2022 = vadd.f32 %v1757, %v2021
        %v2023 = vpop.f32.mrb[0].mxu0
        %2024 = vmatprep.mubr.f32.mxu0 0.0
        %2025 = vmatmul.mubr.f32.gmra.mrb[0].mxu0 %v1821
        %v2026 = vpop.f32.mrb[0].mxu0
        %v2027 = vadd.f32 %v1757, %v2026
        %v2028 = vpop.f32.mrb[0].mxu0
        %2029 = vmatprep.mubr.f32.mxu0 0.0
        %2030 = vmatmul.mubr.f32.gmra.mrb[0].mxu0 %v1824
        %v2031 = vpop.f32.mrb[0].mxu0
        %v2032 = vadd.f32 %v1757, %v2031
        %v2033 = vpop.f32.mrb[0].mxu0
        %2034 = vmatprep.mubr.f32.mxu0 0.0
        %2035 = vmatmul.mubr.f32.gmra.mrb[0].mxu0 %v1827
        %v2036 = vpop.f32.mrb[0].mxu0
        %v2037 = vadd.f32 %v1757, %v2036
        %v2038 = vpop.f32.mrb[0].mxu0
        %2039 = vmatprep.mubr.f32.mxu0 0.0
        %2040 = vmatmul.mubr.f32.gmra.mrb[0].mxu0 %v1830
        %v2041 = vpop.f32.mrb[0].mxu0
        %v2042 = vadd.f32 %v1757, %v2041
        %v2043 = vpop.f32.mrb[0].mxu0
        %2044 = vmatprep.mubr.f32.mxu0 0.0
        %2045 = vmatmul.mubr.f32.gmra.mrb[0].mxu0 %v1833
        %v2046 = vpop.f32.mrb[0].mxu0
        %v2047 = vadd.f32 %v1757, %v2046
        %v2048 = vpop.f32.mrb[0].mxu0
        %2049 = vmatprep.mubr.f32.mxu0 0.0
        %2050 = vmatmul.mubr.f32.gmra.mrb[0].mxu0 %v1836
        %v2051 = vpop.f32.mrb[0].mxu0
        %v2052 = vadd.f32 %v1757, %v2051
        %v2053 = vpop.f32.mrb[0].mxu0
        %2054 = vmatprep.mubr.f32.mxu0 0.0
        %2055 = vmatmul.mubr.f32.gmra.mrb[0].mxu0 %v1839
        %v2056 = vpop.f32.mrb[0].mxu0
        %v2057 = vadd.f32 %v1757, %v2056
        %v2058 = vpop.f32.mrb[0].mxu0
        %2059 = vmatprep.mubr.f32.mxu0 0.0
        %2060 = vmatmul.mubr.f32.gmra.mrb[0].mxu0 %v1842
        %v2061 = vpop.f32.mrb[0].mxu0
        %v2062 = vadd.f32 %v1757, %v2061
        %v2063 = vpop.f32.mrb[0].mxu0
        %2064 = vmatprep.mubr.f32.mxu0 0.0
        %2065 = vmatmul.mubr.f32.gmra.mrb[0].mxu0 %v1845
        %v2066 = vpop.f32.mrb[0].mxu0
        %v2067 = vadd.f32 %v1757, %v2066
        %v2068 = vpop.f32.mrb[0].mxu0
        %2069 = vmatprep.mubr.f32.mxu0 0.0
        %2070 = vmatmul.mubr.f32.gmra.mrb[0].mxu0 %v1848
        %v2071 = vpop.f32.mrb[0].mxu0
        %v2072 = vadd.f32 %v1757, %v2071
        %v2073 = vpop.f32.mrb[0].mxu0
        %2074 = vmatprep.mubr.f32.mxu0 0.0
        %2075 = vmatmul.mubr.f32.gmra.mrb[0].mxu0 %v1851
        %v2076 = vpop.f32.mrb[0].mxu0
        %v2077 = vadd.f32 %v1757, %v2076
        %v2078 = vpop.f32.mrb[0].mxu0
        %2079 = vmatprep.mubr.f32.mxu0 0.0
        %2080 = vmatmul.mubr.f32.gmra.mrb[0].mxu0 %v1854
        %v2081 = vpop.f32.mrb[0].mxu0
        %v2082 = vadd.f32 %v1757, %v2081
        %v2083 = vpop.f32.mrb[0].mxu0
        %2084 = vdwg.mxu0
        %2085 = vst [vmem:[%s163] sm:$0xff] %v1927
        %2086 = vst [vmem:[%s163 + $0x8] sm:$0xff] %v1932
        %2087 = vst [vmem:[%s163 + $0x10] sm:$0xff] %v1937
        %2088 = vst [vmem:[%s163 + $0x18] sm:$0xff] %v1942
        %2089 = vst [vmem:[%s163 + $0x20] sm:$0xff] %v1947
        %2090 = vst [vmem:[%s163 + $0x28] sm:$0xff] %v1952
        %2091 = vst [vmem:[%s163 + $0x30] sm:$0xff] %v1957
        %2092 = vst [vmem:[%s163 + $0x38] sm:$0xff] %v1962
        %2093 = vst [vmem:[%s163 + $0x40] sm:$0xff] %v1967
        %2094 = vst [vmem:[%s163 + $0x48] sm:$0xff] %v1972
        %2095 = vst [vmem:[%s163 + $0x50] sm:$0xff] %v1977
        %2096 = vst [vmem:[%s163 + $0x58] sm:$0xff] %v1982
        %2097 = vst [vmem:[%s163 + $0x60] sm:$0xff] %v1987
        %2098 = vst [vmem:[%s163 + $0x68] sm:$0xff] %v1992
        %2099 = vst [vmem:[%s163 + $0x70] sm:$0xff] %v1997
        %2100 = vst [vmem:[%s163 + $0x78] sm:$0xff] %v2002
        %2101 = vst [vmem:[%s163 + $0x80] sm:$0xff] %v2007
        %2102 = vst [vmem:[%s163 + $0x88] sm:$0xff] %v2012
        %2103 = vst [vmem:[%s163 + $0x90] sm:$0xff] %v2017
        %2104 = vst [vmem:[%s163 + $0x98] sm:$0xff] %v2022
        %2105 = vst [vmem:[%s163 + $0xa0] sm:$0xff] %v2027
        %2106 = vst [vmem:[%s163 + $0xa8] sm:$0xff] %v2032
        %2107 = vst [vmem:[%s163 + $0xb0] sm:$0xff] %v2037
        %2108 = vst [vmem:[%s163 + $0xb8] sm:$0xff] %v2042
        %2109 = vst [vmem:[%s163 + $0xc0] sm:$0xff] %v2047
        %2110 = vst [vmem:[%s163 + $0xc8] sm:$0xff] %v2052
        %2111 = vst [vmem:[%s163 + $0xd0] sm:$0xff] %v2057
        %2112 = vst [vmem:[%s163 + $0xd8] sm:$0xff] %v2062
        %2113 = vst [vmem:[%s163 + $0xe0] sm:$0xff] %v2067
        %2114 = vst [vmem:[%s163 + $0xe8] sm:$0xff] %v2072
        %2115 = vst [vmem:[%s163 + $0xf0] sm:$0xff] %v2077
        %2116 = vst [vmem:[%s163 + $0xf8] sm:$0xff] %v2082
        %s2117 = sand.u32 %s93, 1
        %s2118 = scalar_lea.sflag [#allocation3], %s2117
        %s2119 = sand.u32 %s93, 1
        %s2120 = smul.addr %s2119, 256
        %s2121 = scalar_lea.vmem [#allocation2], %s2120
        // Predicated region
        $region33: #{tpu_custom_call.1} parent=31 // pred_check
          %p2122 = pneg %p103
        $region34: #{tpu_custom_call.1} parent=31 // pred_check_branch
          %2124 = sbr.rel (%p2122) target = $region36
        $region35: #{tpu_custom_call.1} parent=31 // pred_region
          %s2126 = ssub.s32 4096, 4096
          %2127 = vsyncadd %s2118, %s2126
          %s2128 = smul.addr %s17, 32
          %s2129 = smul.addr %s2128, 128
          %s2130 = scalar_lea.hbm %s3, %s2129
          %s2131 = sshll.u32 %s2121, 4
          %s2132 = int_to_ptr.vmem [resolvable:$true] %s2131
          %2137 = dma.vmem_to_hbm [thread:$0]  %s2132, 4096, %s2130, %s2118, 128, 128, 8
        $region36: #{tpu_custom_call.1} parent=31 // pred_fallthru
          _
      $region32: #{tpu_custom_call.1} parent=5 // pred_fallthru
        _
      %p2138 = scmp.le.s32.totalorder 2, %s12
      // Predicated region
      $region37: #{tpu_custom_call.1} parent=5 // pred_check
        %p2139 = pneg %p2138
      $region38: #{tpu_custom_call.1} parent=5 // pred_check_branch
        %2141 = sbr.rel (%p2139) target = $region40
      $region39: #{tpu_custom_call.1} parent=5 // pred_region
        %s2142 = ssub.s32 %s12, 2
        // Predicated region
        $region41: #{tpu_custom_call.1} parent=39 // pred_check
          %p2143 = pneg %p109
        $region42: #{tpu_custom_call.1} parent=39 // pred_check_branch
          %2145 = sbr.rel (%p2143) target = $region44
        $region43: #{tpu_custom_call.1} parent=39 // pred_region
          %s2146 = sand.u32 %s94, 1
          %s2147 = scalar_lea.sflag [#allocation3], %s2146
          %s2148 = sand.u32 %s94, 1
          %s2149 = smul.addr %s2148, 256
          %s2150 = scalar_lea.vmem [#allocation2], %s2149
          %2151 = dma.done %s2147, 4096
        $region44: #{tpu_custom_call.1} parent=39 // pred_fallthru
          _
      $region40: #{tpu_custom_call.1} parent=5 // pred_fallthru
        _
    $region6: #{tpu_custom_call.1} parent=1 // loop_footer
      %s16 = sadd.s32 1, %s12
    $region7: #{tpu_custom_call.1} parent=1 // loop_footer_branch
      %11 = sbr.rel target = $region3
    $region8: #{tpu_custom_call.1} parent=1 // loop_exit
      _
    %2152 = vsyncpa [#allocation3], 1
    %s2153 = scalar_lea.sflag [#allocation3], 1
    %2154 = vsyncpa %s2153, 1

</llo_original>
